<compile_context>
chip_gen: v6e
topology: v6e:2x2x1
jax: 0.10.0
libtpu: 0.0.40
codegen_flags: <defaults>
</compile_context>

<pallas_src>
import jax
import jax.numpy as jnp
from jax.experimental import pallas as pl
from jax.experimental.pallas import tpu as pltpu


# ---------------------------------------------------------------------------
# Kernel
# ---------------------------------------------------------------------------
def _lpmlp_kernel(alpha_ref,            # SMEM (1,1) f32
                  llm_ref, plm_ref,     # VMEM row tiles (TM, LLM_in)/(TM, PLM_in)
                  wd_ref, bd_ref,       # resident weights / biases
                  w1_ref, b1_ref,
                  w2_ref, b2_ref,
                  out_ref):             # VMEM row tile (TM, C_P) bf16
    """Fused: Linear decomposition -> alpha-blend -> MLP encoder (one row tile)."""
    alpha = alpha_ref[0, 0]
    cdt = wd_ref.dtype                  # compute dtype for MXU operands (bf16)

    # decomposition: Linear(LLM_in -> PLM_in), f32 accumulation on the MXU.
    # (cast to compute dtype happens here, not in the wrapper)
    proj = jnp.dot(llm_ref[...].astype(cdt), wd_ref[...],
                   preferred_element_type=jnp.float32) + bd_ref[...]

    # feat = alpha * LLM_proj + (1 - alpha) * PLM_feat   (f32 on the VPU)
    feat = alpha * proj + (1.0 - alpha) * plm_ref[...].astype(jnp.float32)

    # encoder MLP: Linear -> ReLU -> Linear (bf16 operands, f32 accumulators)
    h = jnp.dot(feat.astype(cdt), w1_ref[...],
                preferred_element_type=jnp.float32) + b1_ref[...]
    h = jnp.maximum(h, 0.0)

    out = jnp.dot(h.astype(cdt), w2_ref[...],
                  preferred_element_type=jnp.float32) + b2_ref[...]
    out_ref[...] = out.astype(out_ref.dtype)


# ---------------------------------------------------------------------------
# Wrapper
# ---------------------------------------------------------------------------
def _round_up(x, m):
    return (x + m - 1) // m * m


def _pad_cols(a, cols):
    return jnp.pad(a, ((0, 0), (0, cols - a.shape[1])))


def prepare_params(params, compute_dtype=jnp.bfloat16):
    """One-time weight prep: pad OUTPUT dims (hidden, classes) to 128 lanes and
    cast the matmul operands to the compute dtype. Done once, not per call."""
    plm_in, hidden = params["w1"].shape
    n_classes = params["w2"].shape[1]
    h_p = _round_up(hidden, 128)
    c_p = _round_up(n_classes, 128)
    return {
        # contraction dims (LLM_in, PLM_in, hidden) are kept unpadded on the
        # input side; only output lanes of each linear are padded.
        "wd": params["w_dec"].astype(compute_dtype),                      # (LLM_in, PLM_in)
        "bd": params["b_dec"].astype(jnp.float32),                        # (1, PLM_in)
        "w1": _pad_cols(params["w1"], h_p).astype(compute_dtype),         # (PLM_in, H_P)
        "b1": _pad_cols(params["b1"], h_p).astype(jnp.float32),           # (1, H_P)
        "w2": jnp.pad(params["w2"], ((0, h_p - hidden), (0, c_p - n_classes))
                      ).astype(compute_dtype),                            # (H_P, C_P)
        "b2": _pad_cols(params["b2"], c_p).astype(jnp.float32),           # (1, C_P)
        "n_classes": n_classes,
    }


def _pick_tile_m(n):
    # >= 2 grid steps so both v7x TensorCores get work; multiples of 128 rows;
    # capped at 1024 to keep VMEM small while amortizing per-step overhead.
    tm = _round_up(max(pl.cdiv(n, 2), 1), 128)
    return min(tm, 1024)


def lpmlp_forward(llm_feat, plm_feat, prepared, alpha=0.5, *,
                  tile_m=None, out_dtype=jnp.bfloat16):
    """Fused LPMLP forward (conv != 'SAGE').

    llm_feat: [N, LLM_in] (any float dtype; ideally pre-cast to bf16 once)
    plm_feat: [N, PLM_in]
    prepared: output of prepare_params (padded/bf16 weights)
    returns:  preds [N, n_classes] in out_dtype
    """
    n, llm_in = llm_feat.shape
    plm_in = plm_feat.shape[1]
    h_p = prepared["w1"].shape[1]
    c_p = prepared["w2"].shape[1]
    n_classes = prepared["n_classes"]

    if tile_m is None:
        tile_m = _pick_tile_m(n)
    tile_m = max(8, _round_up(tile_m, 8))
    grid = (pl.cdiv(n, tile_m),)        # ragged last block handled by Pallas

    alpha_arr = jnp.asarray(alpha, jnp.float32).reshape(1, 1)

    # ---- VMEM budget: actual need + small margin (no blanket clamp) --------
    wdt_item = jnp.dtype(prepared["wd"].dtype).itemsize
    llm_item = jnp.dtype(llm_feat.dtype).itemsize
    plm_item = jnp.dtype(plm_feat.dtype).itemsize
    out_item = jnp.dtype(out_dtype).itemsize
    weight_bytes = (llm_in * plm_in + plm_in * h_p + h_p * c_p) * wdt_item
    bias_bytes = (plm_in + h_p + c_p) * 4
    io_bytes = 2 * tile_m * (llm_in * llm_item + plm_in * plm_item
                             + c_p * out_item)                # double-buffered
    temp_bytes = tile_m * (2 * plm_in + h_p + c_p) * 4 \
        + tile_m * (llm_in + plm_in + h_p) * wdt_item         # f32/bf16 temps
    vmem_limit = int(min(max(weight_bytes + bias_bytes + io_bytes + temp_bytes
                             + (4 << 20), 8 << 20), 32 << 20))

    flops = 2 * n * (llm_in * plm_in + plm_in * h_p + h_p * c_p)
    bytes_accessed = (n * (llm_in * llm_item + plm_in * plm_item)
                      + weight_bytes + bias_bytes + n * c_p * out_item)

    resident = lambda a: pl.BlockSpec(a.shape, lambda i: (0, 0))

    out_padded = pl.pallas_call(
        _lpmlp_kernel,
        out_shape=jax.ShapeDtypeStruct((n, c_p), out_dtype),
        grid=grid,
        in_specs=[
            pl.BlockSpec(memory_space=pltpu.MemorySpace.SMEM),    # alpha
            pl.BlockSpec((tile_m, llm_in), lambda i: (i, 0)),     # llm rows (full K)
            pl.BlockSpec((tile_m, plm_in), lambda i: (i, 0)),     # plm rows (full K)
            resident(prepared["wd"]), resident(prepared["bd"]),
            resident(prepared["w1"]), resident(prepared["b1"]),
            resident(prepared["w2"]), resident(prepared["b2"]),
        ],
        out_specs=pl.BlockSpec((tile_m, c_p), lambda i: (i, 0)),
        compiler_params=pltpu.CompilerParams(
            dimension_semantics=("parallel",),
            vmem_limit_bytes=vmem_limit),
        cost_estimate=pl.CostEstimate(flops=int(flops),
                                      transcendentals=0,
                                      bytes_accessed=int(bytes_accessed)),
    )(alpha_arr, llm_feat, plm_feat,
      prepared["wd"], prepared["bd"],
      prepared["w1"], prepared["b1"],
      prepared["w2"], prepared["b2"])

    return out_padded[:, :n_classes]


# ---------------------------------------------------------------------------
# Pure-JAX reference (mirrors the PyTorch forward with the same bf16/f32 path)
# ---------------------------------------------------------------------------
def lpmlp_reference(llm_feat, plm_feat, params, alpha=0.5,
                    compute_dtype=jnp.bfloat16):
    f32 = jnp.float32
    proj = jnp.dot(llm_feat.astype(compute_dtype),
                   params["w_dec"].astype(compute_dtype),
                   preferred_element_type=f32) + params["b_dec"].astype(f32)
    feat = alpha * proj + (1.0 - alpha) * plm_feat.astype(compute_dtype).astype(f32)
    h = jnp.dot(feat.astype(compute_dtype), params["w1"].astype(compute_dtype),
                preferred_element_type=f32) + params["b1"].astype(f32)
    h = jnp.maximum(h, 0.0)
    return jnp.dot(h.astype(compute_dtype), params["w2"].astype(compute_dtype),
                   preferred_element_type=f32) + params["b2"].astype(f32)


def init_params(key, llm_in, plm_in, hidden, n_classes):
    ks = jax.random.split(key, 6)
    scale = lambda fan_in: 1.0 / jnp.sqrt(jnp.float32(fan_in))
    u = lambda k, shape, s: jax.random.uniform(k, shape, jnp.float32, -s, s)
    return {
        "w_dec": u(ks[0], (llm_in, plm_in), scale(llm_in)),
        "b_dec": u(ks[1], (1, plm_in), scale(llm_in)),
        "w1": u(ks[2], (plm_in, hidden), scale(plm_in)),
        "b1": u(ks[3], (1, hidden), scale(plm_in)),
        "w2": u(ks[4], (hidden, n_classes), scale(hidden)),
        "b2": u(ks[5], (1, n_classes), scale(hidden)),
    }


if __name__ == "__main__":
    key = jax.random.PRNGKey(0)

    # Small but non-trivial shapes (N ragged vs tile, odd feature widths).
    N, LLM_IN, PLM_IN, HIDDEN, N_CLASSES = 777, 192, 96, 80, 7
    ALPHA = 0.4

    k_llm, k_plm, k_params = jax.random.split(key, 3)
    llm_f32 = jax.random.normal(k_llm, (N, LLM_IN), jnp.float32)
    plm_f32 = jax.random.normal(k_plm, (N, PLM_IN), jnp.float32)
    params = init_params(k_params, LLM_IN, PLM_IN, HIDDEN, N_CLASSES)

    # One-time data-load-time cast (features) and weight prep (pad + bf16);
    # the per-call forward does no extra HBM passes over the features.
    llm_feat = llm_f32.astype(jnp.bfloat16)
    plm_feat = plm_f32.astype(jnp.bfloat16)
    prepared = prepare_params(params)

    preds = lpmlp_forward(llm_feat, plm_feat, prepared, alpha=ALPHA)
    preds = jax.block_until_ready(preds)

    ref = lpmlp_reference(llm_feat, plm_feat, params, alpha=ALPHA)
    assert preds.shape == (N, N_CLASSES)
    err = float(jnp.max(jnp.abs(preds.astype(jnp.float32) - ref)))
    assert jnp.allclose(preds.astype(jnp.float32), ref, atol=3e-2, rtol=3e-2), err

    print("KERNEL_OK")
</pallas_src>

<mosaic_0001>
module attributes {stable_mosaic.version = 11 : i64} {
  func.func @_lpmlp_kernel(%arg0: i32, %arg1: memref<1x1xf32, #tpu.memory_space<smem>>, %arg2: memref<512x192xbf16, #tpu.memory_space<vmem>>, %arg3: memref<512x96xbf16, #tpu.memory_space<vmem>>, %arg4: memref<192x96xbf16, #tpu.memory_space<vmem>>, %arg5: memref<1x96xf32, #tpu.memory_space<vmem>>, %arg6: memref<96x128xbf16, #tpu.memory_space<vmem>>, %arg7: memref<1x128xf32, #tpu.memory_space<vmem>>, %arg8: memref<128x128xbf16, #tpu.memory_space<vmem>>, %arg9: memref<1x128xf32, #tpu.memory_space<vmem>>, %arg10: memref<512x128xbf16, #tpu.memory_space<vmem>>) attributes {dimension_semantics = [#tpu.dimension_semantics<parallel>], iteration_bounds = array<i64: 2>, scalar_prefetch = 0 : i64, scratch_operands = 0 : i64, tpu.core_type = #tpu.core_type<tc>, window_params = [{transform_indices = @transform_0, window_bounds = array<i64: 1, 1>}, {transform_indices = @transform_1, window_bounds = array<i64: 512, 192>}, {transform_indices = @transform_2, window_bounds = array<i64: 512, 96>}, {pipeline_mode = #tpu.pipeline_mode<synchronous>, transform_indices = @transform_3, window_bounds = array<i64: 192, 96>}, {pipeline_mode = #tpu.pipeline_mode<synchronous>, transform_indices = @transform_4, window_bounds = array<i64: 1, 96>}, {pipeline_mode = #tpu.pipeline_mode<synchronous>, transform_indices = @transform_5, window_bounds = array<i64: 96, 128>}, {pipeline_mode = #tpu.pipeline_mode<synchronous>, transform_indices = @transform_6, window_bounds = array<i64: 1, 128>}, {pipeline_mode = #tpu.pipeline_mode<synchronous>, transform_indices = @transform_7, window_bounds = array<i64: 128, 128>}, {pipeline_mode = #tpu.pipeline_mode<synchronous>, transform_indices = @transform_8, window_bounds = array<i64: 1, 128>}, {transform_indices = @transform_9, window_bounds = array<i64: 512, 128>}]} {
    %c0 = arith.constant 0 : index
    %c0_0 = arith.constant 0 : index
    %0 = memref.load %arg1[%c0, %c0_0] : memref<1x1xf32, #tpu.memory_space<smem>>
    %c0_1 = arith.constant 0 : index
    %c0_2 = arith.constant 0 : index
    %1 = vector.load %arg2[%c0_1, %c0_2] : memref<512x192xbf16, #tpu.memory_space<vmem>>, vector<512x192xbf16>
    %c0_3 = arith.constant 0 : index
    %c0_4 = arith.constant 0 : index
    %2 = vector.load %arg4[%c0_3, %c0_4] : memref<192x96xbf16, #tpu.memory_space<vmem>>, vector<192x96xbf16>
    %cst = arith.constant dense<0.000000e+00> : vector<512x96xf32>
    %3 = tpu.matmul %1, %2, %cst {dimension_numbers = #tpu.dot_dimension_numbers<[1], [0], [0], [1], [0, 0, 1, 1], [], []>} : vector<512x192xbf16>, vector<192x96xbf16>, vector<512x96xf32> -> vector<512x96xf32>
    %c0_5 = arith.constant 0 : index
    %c0_6 = arith.constant 0 : index
    %4 = vector.load %arg5[%c0_5, %c0_6] : memref<1x96xf32, #tpu.memory_space<vmem>>, vector<1x96xf32>
    %5 = vector.broadcast %4 : vector<1x96xf32> to vector<512x96xf32>
    %6 = arith.addf %3, %5 : vector<512x96xf32>
    %7 = vector.broadcast %0 : f32 to vector<512x96xf32>
    %8 = arith.mulf %7, %6 : vector<512x96xf32>
    %cst_7 = arith.constant 1.000000e+00 : f32
    %9 = arith.subf %cst_7, %0 : f32
    %c0_8 = arith.constant 0 : index
    %c0_9 = arith.constant 0 : index
    %10 = vector.load %arg3[%c0_8, %c0_9] : memref<512x96xbf16, #tpu.memory_space<vmem>>, vector<512x96xbf16>
    %11 = arith.extf %10 : vector<512x96xbf16> to vector<512x96xf32>
    %12 = vector.broadcast %9 : f32 to vector<512x96xf32>
    %13 = arith.mulf %12, %11 : vector<512x96xf32>
    %14 = arith.addf %8, %13 : vector<512x96xf32>
    %15 = arith.truncf %14 : vector<512x96xf32> to vector<512x96xbf16>
    %c0_10 = arith.constant 0 : index
    %c0_11 = arith.constant 0 : index
    %16 = vector.load %arg6[%c0_10, %c0_11] : memref<96x128xbf16, #tpu.memory_space<vmem>>, vector<96x128xbf16>
    %cst_12 = arith.constant dense<0.000000e+00> : vector<512x128xf32>
    %17 = tpu.matmul %15, %16, %cst_12 {dimension_numbers = #tpu.dot_dimension_numbers<[1], [0], [0], [1], [0, 0, 1, 1], [], []>} : vector<512x96xbf16>, vector<96x128xbf16>, vector<512x128xf32> -> vector<512x128xf32>
    %c0_13 = arith.constant 0 : index
    %c0_14 = arith.constant 0 : index
    %18 = vector.load %arg7[%c0_13, %c0_14] : memref<1x128xf32, #tpu.memory_space<vmem>>, vector<1x128xf32>
    %19 = vector.broadcast %18 : vector<1x128xf32> to vector<512x128xf32>
    %20 = arith.addf %17, %19 : vector<512x128xf32>
    %cst_15 = arith.constant 0.000000e+00 : f32
    %21 = vector.broadcast %cst_15 : f32 to vector<512x128xf32>
    %22 = arith.maximumf %20, %21 : vector<512x128xf32>
    %23 = arith.truncf %22 : vector<512x128xf32> to vector<512x128xbf16>
    %c0_16 = arith.constant 0 : index
    %c0_17 = arith.constant 0 : index
    %24 = vector.load %arg8[%c0_16, %c0_17] : memref<128x128xbf16, #tpu.memory_space<vmem>>, vector<128x128xbf16>
    %cst_18 = arith.constant dense<0.000000e+00> : vector<512x128xf32>
    %25 = tpu.matmul %23, %24, %cst_18 {dimension_numbers = #tpu.dot_dimension_numbers<[1], [0], [0], [1], [0, 0, 1, 1], [], []>} : vector<512x128xbf16>, vector<128x128xbf16>, vector<512x128xf32> -> vector<512x128xf32>
    %c0_19 = arith.constant 0 : index
    %c0_20 = arith.constant 0 : index
    %26 = vector.load %arg9[%c0_19, %c0_20] : memref<1x128xf32, #tpu.memory_space<vmem>>, vector<1x128xf32>
    %27 = vector.broadcast %26 : vector<1x128xf32> to vector<512x128xf32>
    %28 = arith.addf %25, %27 : vector<512x128xf32>
    %29 = arith.truncf %28 : vector<512x128xf32> to vector<512x128xbf16>
    %c0_21 = arith.constant 0 : index
    %c0_22 = arith.constant 0 : index
    %30 = vector.load %arg10[%c0_21, %c0_22] : memref<512x128xbf16, #tpu.memory_space<vmem>>, vector<512x128xbf16>
    tpu.vector_store %arg10[%c0_21, %c0_22], %29 {strides = array<i32>} : memref<512x128xbf16, #tpu.memory_space<vmem>>, vector<512x128xbf16>,
    return
  }
  func.func @transform_0(%arg0: i32) -> (i32, i32) {
    %c0_i32 = arith.constant 0 : i32
    %c0_i32_0 = arith.constant 0 : i32
    %c0_i32_1 = arith.constant 0 : i32
    return %c0_i32, %c0_i32_0 : i32, i32
  }
  func.func @transform_1(%arg0: i32) -> (i32, i32) {
    %c0_i32 = arith.constant 0 : i32
    %c0_i32_0 = arith.constant 0 : i32
    return %arg0, %c0_i32 : i32, i32
  }
  func.func @transform_2(%arg0: i32) -> (i32, i32) {
    %c0_i32 = arith.constant 0 : i32
    %c0_i32_0 = arith.constant 0 : i32
    return %arg0, %c0_i32 : i32, i32
  }
  func.func @transform_3(%arg0: i32) -> (i32, i32) {
    %c0_i32 = arith.constant 0 : i32
    %c0_i32_0 = arith.constant 0 : i32
    %c0_i32_1 = arith.constant 0 : i32
    return %c0_i32, %c0_i32_0 : i32, i32
  }
  func.func @transform_4(%arg0: i32) -> (i32, i32) {
    %c0_i32 = arith.constant 0 : i32
    %c0_i32_0 = arith.constant 0 : i32
    %c0_i32_1 = arith.constant 0 : i32
    return %c0_i32, %c0_i32_0 : i32, i32
  }
  func.func @transform_5(%arg0: i32) -> (i32, i32) {
    %c0_i32 = arith.constant 0 : i32
    %c0_i32_0 = arith.constant 0 : i32
    %c0_i32_1 = arith.constant 0 : i32
    return %c0_i32, %c0_i32_0 : i32, i32
  }
  func.func @transform_6(%arg0: i32) -> (i32, i32) {
    %c0_i32 = arith.constant 0 : i32
    %c0_i32_0 = arith.constant 0 : i32
    %c0_i32_1 = arith.constant 0 : i32
    return %c0_i32, %c0_i32_0 : i32, i32
  }
  func.func @transform_7(%arg0: i32) -> (i32, i32) {
    %c0_i32 = arith.constant 0 : i32
    %c0_i32_0 = arith.constant 0 : i32
    %c0_i32_1 = arith.constant 0 : i32
    return %c0_i32, %c0_i32_0 : i32, i32
  }
  func.func @transform_8(%arg0: i32) -> (i32, i32) {
    %c0_i32 = arith.constant 0 : i32
    %c0_i32_0 = arith.constant 0 : i32
    %c0_i32_1 = arith.constant 0 : i32
    return %c0_i32, %c0_i32_0 : i32, i32
  }
  func.func @transform_9(%arg0: i32) -> (i32, i32) {
    %c0_i32 = arith.constant 0 : i32
    %c0_i32_0 = arith.constant 0 : i32
    return %arg0, %c0_i32 : i32, i32
  }
}

</mosaic_0001>

<llo_original>
// kernel: tpu_custom_call.1
$region0: #{tpu_custom_call.1}
  #allocation0 [shape = 'u32[]', space=smem, size = 0x4, offset = 0x4, fixed_abs, tag = 'smem constant byte address 0x4 - core index']
  #allocation1 [shape = 'u32[144,128]{1,0:T(1,128)}', space=vmem, size = 0x12000, scoped, tag = 'internal scratch']
  #allocation2 [shape = 'f32[1,1]{1,0:T(1,128)S(6)}', space=smem, size = 0x200, scoped, tag = 'scoped memory for tpu_custom_call.1']
  %s0 = inlined_call_operand.<no memory space> [shape: f32[1,1], index: 0, kind: input, shape index: {}]
  %s1 = inlined_call_operand.vmem [shape: bf16[777,192], index: 1, kind: input, shape index: {}]
  %s2 = inlined_call_operand.vmem [shape: bf16[777,96], index: 2, kind: input, shape index: {}]
  %s3 = inlined_call_operand.vmem [shape: bf16[192,96], index: 3, kind: input, shape index: {}]
  %s4 = inlined_call_operand.vmem [shape: f32[1,96], index: 4, kind: input, shape index: {}]
  %s5 = inlined_call_operand.vmem [shape: bf16[96,128], index: 5, kind: input, shape index: {}]
  %s6 = inlined_call_operand.vmem [shape: f32[1,128], index: 6, kind: input, shape index: {}]
  %s7 = inlined_call_operand.vmem [shape: bf16[128,128], index: 7, kind: input, shape index: {}]
  %s8 = inlined_call_operand.vmem [shape: f32[1,128], index: 8, kind: input, shape index: {}]
  %s9 = inlined_call_operand.hbm [shape: bf16[777,128], index: 9, kind: output, shape index: {}]
  %s10 = sld [smem:[#allocation0]]
  $region69: #{tpu_custom_call.1} parent=0
    _
  %s12 = ssub.s32 1, %s10
  %s13 = scalar_select 0, %s12, %s10
  %14 = sst [smem:[#allocation2]] %s0
  $region1: #{tpu_custom_call.1} parent=0
    #allocation3 [shape = 'u8[262144]{0}', space=vmem, size = 0x40000, scoped, tag = 'output window, operand 0']
    #allocation4 [shape = 's32[2]{0}', space=sflag, size = 0x8, scoped, tag = 'scoped memory for tpu_custom_call.1']
    %15 = vsyncpa [#allocation4], 0
    %s16 = scalar_lea.sflag [#allocation4], 1
    %17 = vsyncpa %s16, 0
    loop: start=0, step=1, limit=4
    $region2: #{tpu_custom_call.1} parent=1 // loop_pre_header
      _
    $region3: #{tpu_custom_call.1} parent=1 // loop_header
      %s19 = sphi 0, %s23
      %p20 = scmp.ge.s32.totalorder %s19, 4
      %s27 = sphi 0, %s27
      %s29 = sphi 0, %s27
      %s30 = sphi 0, %s29
      %s44 = sphi 0, %s30
      %s50 = sphi 0, %s52
      %s53 = sphi 0, %s50
      %s54 = sphi 0, %s53
      %s70 = sphi 0, %s54
      %s76 = sphi 0, %s78
      %s79 = sphi 0, %s76
      %s80 = sphi 0, %s79
      %s96 = sphi 0, %s80
      %s100 = sphi 0, %s100
      %s102 = sphi 0, %s100
      %s103 = sphi 0, %s102
      %s117 = sphi 0, %s103
      %s121 = sphi 0, %s121
      %s123 = sphi 0, %s121
      %s124 = sphi 0, %s123
      %s138 = sphi 0, %s124
      %s142 = sphi 0, %s142
      %s144 = sphi 0, %s142
      %s145 = sphi 0, %s144
      %s159 = sphi 0, %s145
      %s163 = sphi 0, %s163
      %s165 = sphi 0, %s163
      %s166 = sphi 0, %s165
      %s180 = sphi 0, %s166
      %s184 = sphi 0, %s184
      %s186 = sphi 0, %s184
      %s187 = sphi 0, %s186
      %s201 = sphi 0, %s187
      %s205 = sphi 0, %s205
      %s207 = sphi 0, %s205
      %s208 = sphi 0, %s207
      %s222 = sphi 0, %s208
      %s228 = sphi 0, %s230
      %s231 = sphi 0, %s228
      %s232 = sphi 0, %s231
      %s248 = sphi 0, %s232
    $region4: #{tpu_custom_call.1} parent=1 // loop_header_branch
      %22 = sbr.rel (%p20) target = $region8
    $region5: #{tpu_custom_call.1} parent=1 // loop_body
      %s24 = ssub.s32 %s19, 1
      %s25 = ssub.s32 %s19, 2
      %s26 = sadd.s32 %s19, 1
      %s28 = sadd.s32 %s27, 1
      %p31 = scmp.eq.s32.totalorder %s19, 1
      %p32 = scmp.ne.s32.totalorder %s27, %s29
      %p33 = scmp.eq.s32.totalorder %s19, 0
      %p34 = por %p32, %p33
      %p35 = scmp.ne.s32.totalorder %s27, %s29
      %p36 = scmp.eq.s32.totalorder %s24, 1
      %p37 = por %p35, %p36
      %p38 = scmp.ne.s32.totalorder %s29, %s30
      %p39 = scmp.eq.s32.totalorder %s24, 0
      %p40 = por %p38, %p39
      %p41 = scmp.ne.s32.totalorder %s29, %s30
      %p42 = scmp.eq.s32.totalorder %s25, 1
      %p43 = por %p41, %p42
      %p45 = scmp.ne.s32.totalorder %s30, %s44
      %p46 = scmp.eq.s32.totalorder %s25, 0
      %p47 = por %p45, %p46
      %s48 = ssub.s32 %s19, %s26
      %p49 = scmp.eq.s32.totalorder %s48, 0
      %s51 = sadd.s32 %s50, 1
      %s52 = scalar_select %p49, %s50, %s51
      %p55 = pneg %p49
      %p56 = scmp.eq.s32.totalorder %s19, 1
      %p57 = por %p55, %p56
      %p58 = scmp.ne.s32.totalorder %s50, %s53
      %p59 = scmp.eq.s32.totalorder %s19, 0
      %p60 = por %p58, %p59
      %p61 = scmp.ne.s32.totalorder %s50, %s53
      %p62 = scmp.eq.s32.totalorder %s24, 1
      %p63 = por %p61, %p62
      %p64 = scmp.ne.s32.totalorder %s53, %s54
      %p65 = scmp.eq.s32.totalorder %s24, 0
      %p66 = por %p64, %p65
      %p67 = scmp.ne.s32.totalorder %s53, %s54
      %p68 = scmp.eq.s32.totalorder %s25, 1
      %p69 = por %p67, %p68
      %p71 = scmp.ne.s32.totalorder %s54, %s70
      %p72 = scmp.eq.s32.totalorder %s25, 0
      %p73 = por %p71, %p72
      %s74 = ssub.s32 %s19, %s26
      %p75 = scmp.eq.s32.totalorder %s74, 0
      %s77 = sadd.s32 %s76, 1
      %s78 = scalar_select %p75, %s76, %s77
      %p81 = pneg %p75
      %p82 = scmp.eq.s32.totalorder %s19, 1
      %p83 = por %p81, %p82
      %p84 = scmp.ne.s32.totalorder %s76, %s79
      %p85 = scmp.eq.s32.totalorder %s19, 0
      %p86 = por %p84, %p85
      %p87 = scmp.ne.s32.totalorder %s76, %s79
      %p88 = scmp.eq.s32.totalorder %s24, 1
      %p89 = por %p87, %p88
      %p90 = scmp.ne.s32.totalorder %s79, %s80
      %p91 = scmp.eq.s32.totalorder %s24, 0
      %p92 = por %p90, %p91
      %p93 = scmp.ne.s32.totalorder %s79, %s80
      %p94 = scmp.eq.s32.totalorder %s25, 1
      %p95 = por %p93, %p94
      %p97 = scmp.ne.s32.totalorder %s80, %s96
      %p98 = scmp.eq.s32.totalorder %s25, 0
      %p99 = por %p97, %p98
      %s101 = sadd.s32 %s100, 1
      %p104 = scmp.eq.s32.totalorder %s19, 1
      %p105 = scmp.ne.s32.totalorder %s100, %s102
      %p106 = scmp.eq.s32.totalorder %s19, 0
      %p107 = por %p105, %p106
      %p108 = scmp.ne.s32.totalorder %s100, %s102
      %p109 = scmp.eq.s32.totalorder %s24, 1
      %p110 = por %p108, %p109
      %p111 = scmp.ne.s32.totalorder %s102, %s103
      %p112 = scmp.eq.s32.totalorder %s24, 0
      %p113 = por %p111, %p112
      %p114 = scmp.ne.s32.totalorder %s102, %s103
      %p115 = scmp.eq.s32.totalorder %s25, 1
      %p116 = por %p114, %p115
      %p118 = scmp.ne.s32.totalorder %s103, %s117
      %p119 = scmp.eq.s32.totalorder %s25, 0
      %p120 = por %p118, %p119
      %s122 = sadd.s32 %s121, 1
      %p125 = scmp.eq.s32.totalorder %s19, 1
      %p126 = scmp.ne.s32.totalorder %s121, %s123
      %p127 = scmp.eq.s32.totalorder %s19, 0
      %p128 = por %p126, %p127
      %p129 = scmp.ne.s32.totalorder %s121, %s123
      %p130 = scmp.eq.s32.totalorder %s24, 1
      %p131 = por %p129, %p130
      %p132 = scmp.ne.s32.totalorder %s123, %s124
      %p133 = scmp.eq.s32.totalorder %s24, 0
      %p134 = por %p132, %p133
      %p135 = scmp.ne.s32.totalorder %s123, %s124
      %p136 = scmp.eq.s32.totalorder %s25, 1
      %p137 = por %p135, %p136
      %p139 = scmp.ne.s32.totalorder %s124, %s138
      %p140 = scmp.eq.s32.totalorder %s25, 0
      %p141 = por %p139, %p140
      %s143 = sadd.s32 %s142, 1
      %p146 = scmp.eq.s32.totalorder %s19, 1
      %p147 = scmp.ne.s32.totalorder %s142, %s144
      %p148 = scmp.eq.s32.totalorder %s19, 0
      %p149 = por %p147, %p148
      %p150 = scmp.ne.s32.totalorder %s142, %s144
      %p151 = scmp.eq.s32.totalorder %s24, 1
      %p152 = por %p150, %p151
      %p153 = scmp.ne.s32.totalorder %s144, %s145
      %p154 = scmp.eq.s32.totalorder %s24, 0
      %p155 = por %p153, %p154
      %p156 = scmp.ne.s32.totalorder %s144, %s145
      %p157 = scmp.eq.s32.totalorder %s25, 1
      %p158 = por %p156, %p157
      %p160 = scmp.ne.s32.totalorder %s145, %s159
      %p161 = scmp.eq.s32.totalorder %s25, 0
      %p162 = por %p160, %p161
      %s164 = sadd.s32 %s163, 1
      %p167 = scmp.eq.s32.totalorder %s19, 1
      %p168 = scmp.ne.s32.totalorder %s163, %s165
      %p169 = scmp.eq.s32.totalorder %s19, 0
      %p170 = por %p168, %p169
      %p171 = scmp.ne.s32.totalorder %s163, %s165
      %p172 = scmp.eq.s32.totalorder %s24, 1
      %p173 = por %p171, %p172
      %p174 = scmp.ne.s32.totalorder %s165, %s166
      %p175 = scmp.eq.s32.totalorder %s24, 0
      %p176 = por %p174, %p175
      %p177 = scmp.ne.s32.totalorder %s165, %s166
      %p178 = scmp.eq.s32.totalorder %s25, 1
      %p179 = por %p177, %p178
      %p181 = scmp.ne.s32.totalorder %s166, %s180
      %p182 = scmp.eq.s32.totalorder %s25, 0
      %p183 = por %p181, %p182
      %s185 = sadd.s32 %s184, 1
      %p188 = scmp.eq.s32.totalorder %s19, 1
      %p189 = scmp.ne.s32.totalorder %s184, %s186
      %p190 = scmp.eq.s32.totalorder %s19, 0
      %p191 = por %p189, %p190
      %p192 = scmp.ne.s32.totalorder %s184, %s186
      %p193 = scmp.eq.s32.totalorder %s24, 1
      %p194 = por %p192, %p193
      %p195 = scmp.ne.s32.totalorder %s186, %s187
      %p196 = scmp.eq.s32.totalorder %s24, 0
      %p197 = por %p195, %p196
      %p198 = scmp.ne.s32.totalorder %s186, %s187
      %p199 = scmp.eq.s32.totalorder %s25, 1
      %p200 = por %p198, %p199
      %p202 = scmp.ne.s32.totalorder %s187, %s201
      %p203 = scmp.eq.s32.totalorder %s25, 0
      %p204 = por %p202, %p203
      %s206 = sadd.s32 %s205, 1
      %p209 = scmp.eq.s32.totalorder %s19, 1
      %p210 = scmp.ne.s32.totalorder %s205, %s207
      %p211 = scmp.eq.s32.totalorder %s19, 0
      %p212 = por %p210, %p211
      %p213 = scmp.ne.s32.totalorder %s205, %s207
      %p214 = scmp.eq.s32.totalorder %s24, 1
      %p215 = por %p213, %p214
      %p216 = scmp.ne.s32.totalorder %s207, %s208
      %p217 = scmp.eq.s32.totalorder %s24, 0
      %p218 = por %p216, %p217
      %p219 = scmp.ne.s32.totalorder %s207, %s208
      %p220 = scmp.eq.s32.totalorder %s25, 1
      %p221 = por %p219, %p220
      %p223 = scmp.ne.s32.totalorder %s208, %s222
      %p224 = scmp.eq.s32.totalorder %s25, 0
      %p225 = por %p223, %p224
      %s226 = ssub.s32 %s19, %s26
      %p227 = scmp.eq.s32.totalorder %s226, 0
      %s229 = sadd.s32 %s228, 1
      %s230 = scalar_select %p227, %s228, %s229
      %p233 = pneg %p227
      %p234 = scmp.eq.s32.totalorder %s19, 1
      %p235 = por %p233, %p234
      %p236 = scmp.ne.s32.totalorder %s228, %s231
      %p237 = scmp.eq.s32.totalorder %s19, 0
      %p238 = por %p236, %p237
      %p239 = scmp.ne.s32.totalorder %s228, %s231
      %p240 = scmp.eq.s32.totalorder %s24, 1
      %p241 = por %p239, %p240
      %p242 = scmp.ne.s32.totalorder %s231, %s232
      %p243 = scmp.eq.s32.totalorder %s24, 0
      %p244 = por %p242, %p243
      %p245 = scmp.ne.s32.totalorder %s231, %s232
      %p246 = scmp.eq.s32.totalorder %s25, 1
      %p247 = por %p245, %p246
      %p249 = scmp.ne.s32.totalorder %s232, %s248
      %p250 = scmp.eq.s32.totalorder %s25, 0
      %p251 = por %p249, %p250
      %p252 = scmp.le.s32.totalorder 1, %s19
      %p253 = scmp.lt.s32.totalorder %s19, 3
      %p254 = pnand %p252, %p253
      %p255 = pneg %p254
      // Predicated region
      $region9: #{tpu_custom_call.1} parent=5 // pred_check
        _
      $region10: #{tpu_custom_call.1} parent=5 // pred_check_branch
        %257 = sbr.rel (%p254) target = $region12
      $region11: #{tpu_custom_call.1} parent=5 // pred_region
        %s258 = ssub.s32 %s19, 1
        // Predicated region
        $region13: #{tpu_custom_call.1} parent=11 // pred_check
          %p259 = pneg %p40
        $region14: #{tpu_custom_call.1} parent=11 // pred_check_branch
          %261 = sbr.rel (%p259) target = $region16
        $region15: #{tpu_custom_call.1} parent=11 // pred_region
          _
        $region16: #{tpu_custom_call.1} parent=11 // pred_fallthru
          _
        // Predicated region
        $region17: #{tpu_custom_call.1} parent=11 // pred_check
          %p262 = pneg %p113
        $region18: #{tpu_custom_call.1} parent=11 // pred_check_branch
          %264 = sbr.rel (%p262) target = $region20
        $region19: #{tpu_custom_call.1} parent=11 // pred_region
          _
        $region20: #{tpu_custom_call.1} parent=11 // pred_fallthru
          _
        // Predicated region
        $region21: #{tpu_custom_call.1} parent=11 // pred_check
          %p265 = pneg %p134
        $region22: #{tpu_custom_call.1} parent=11 // pred_check_branch
          %267 = sbr.rel (%p265) target = $region24
        $region23: #{tpu_custom_call.1} parent=11 // pred_region
          _
        $region24: #{tpu_custom_call.1} parent=11 // pred_fallthru
          _
        // Predicated region
        $region25: #{tpu_custom_call.1} parent=11 // pred_check
          %p268 = pneg %p155
        $region26: #{tpu_custom_call.1} parent=11 // pred_check_branch
          %270 = sbr.rel (%p268) target = $region28
        $region27: #{tpu_custom_call.1} parent=11 // pred_region
          _
        $region28: #{tpu_custom_call.1} parent=11 // pred_fallthru
          _
        // Predicated region
        $region29: #{tpu_custom_call.1} parent=11 // pred_check
          %p271 = pneg %p176
        $region30: #{tpu_custom_call.1} parent=11 // pred_check_branch
          %273 = sbr.rel (%p271) target = $region32
        $region31: #{tpu_custom_call.1} parent=11 // pred_region
          _
        $region32: #{tpu_custom_call.1} parent=11 // pred_fallthru
          _
        // Predicated region
        $region33: #{tpu_custom_call.1} parent=11 // pred_check
          %p274 = pneg %p197
        $region34: #{tpu_custom_call.1} parent=11 // pred_check_branch
          %276 = sbr.rel (%p274) target = $region36
        $region35: #{tpu_custom_call.1} parent=11 // pred_region
          _
        $region36: #{tpu_custom_call.1} parent=11 // pred_fallthru
          _
        // Predicated region
        $region37: #{tpu_custom_call.1} parent=11 // pred_check
          %p277 = pneg %p218
        $region38: #{tpu_custom_call.1} parent=11 // pred_check_branch
          %279 = sbr.rel (%p277) target = $region40
        $region39: #{tpu_custom_call.1} parent=11 // pred_region
          _
        $region40: #{tpu_custom_call.1} parent=11 // pred_fallthru
          _
      $region12: #{tpu_custom_call.1} parent=5 // pred_fallthru
        _
      %p280 = scmp.lt.s32.totalorder %s19, 2
      // Predicated region
      $region41: #{tpu_custom_call.1} parent=5 // pred_check
        %p281 = pneg %p280
      $region42: #{tpu_custom_call.1} parent=5 // pred_check_branch
        %283 = sbr.rel (%p281) target = $region44
      $region43: #{tpu_custom_call.1} parent=5 // pred_region
        // Predicated region
        $region45: #{tpu_custom_call.1} parent=43 // pred_check
          %p284 = pneg %p60
        $region46: #{tpu_custom_call.1} parent=43 // pred_check_branch
          %286 = sbr.rel (%p284) target = $region48
        $region47: #{tpu_custom_call.1} parent=43 // pred_region
          %s287 = smul.u32 64, %s19
          %s288 = ssub.s32 98, %s287
          %p289 = scmp.lt.s32.totalorder %s288, 64
          %s290 = scalar_select %p289, %s288, 64
          %s291 = smul.u32 64, %s290
          %s292 = smul.u32 %s291, 2
          %p293 = scmp.lt.s32.totalorder %s287, 97
          %s294 = scalar_select %p293, %s287, 97
          %s295 = smul.addr %s294, 2
          %s296 = smul.addr %s295, 4
          %s297 = scalar_lea.vmem %s1, %s296
          %s298 = smul.u32 64, %s19
          %s299 = ssub.s32 98, %s298
          %p300 = scmp.lt.s32.totalorder %s299, 64
          %s301 = scalar_select %p300, %s299, 64
          %s302 = smul.u32 64, %s301
          %s303 = smul.u32 %s302, 2
        $region48: #{tpu_custom_call.1} parent=43 // pred_fallthru
          _
        // Predicated region
        $region49: #{tpu_custom_call.1} parent=43 // pred_check
          %p304 = pneg %p86
        $region50: #{tpu_custom_call.1} parent=43 // pred_check_branch
          %306 = sbr.rel (%p304) target = $region52
        $region51: #{tpu_custom_call.1} parent=43 // pred_region
          %s307 = smul.u32 64, %s19
          %s308 = ssub.s32 98, %s307
          %p309 = scmp.lt.s32.totalorder %s308, 64
          %s310 = scalar_select %p309, %s308, 64
          %s311 = smul.u32 64, %s310
          %p312 = scmp.lt.s32.totalorder %s307, 97
          %s313 = scalar_select %p312, %s307, 97
          %s314 = smul.addr %s313, 4
          %s315 = scalar_lea.vmem %s2, %s314
          %s316 = smul.u32 64, %s19
          %s317 = ssub.s32 98, %s316
          %p318 = scmp.lt.s32.totalorder %s317, 64
          %s319 = scalar_select %p318, %s317, 64
          %s320 = smul.u32 64, %s319
        $region52: #{tpu_custom_call.1} parent=43 // pred_fallthru
          _
      $region44: #{tpu_custom_call.1} parent=5 // pred_fallthru
        _
      %p321 = scmp.le.s32.totalorder 1, %s19
      %p322 = scmp.lt.s32.totalorder %s19, 3
      %p323 = pnand %p321, %p322
      %p324 = pneg %p323
      // Predicated region
      $region53: #{tpu_custom_call.1} parent=5 // pred_check
        _
      $region54: #{tpu_custom_call.1} parent=5 // pred_check_branch
        %326 = sbr.rel (%p323) target = $region56
      $region55: #{tpu_custom_call.1} parent=5 // pred_region
        %s327 = ssub.s32 %s19, 1
        %p328 = pneg %p40
        %p329 = pneg %p37
        %s330 = smul.u32 64, %s24
        %s331 = ssub.s32 98, %s330
        %p332 = scmp.lt.s32.totalorder %s331, 64
        %s333 = scalar_select %p332, %s331, 64
        %s334 = smul.u32 64, %s333
        %s335 = smul.u32 %s334, 2
        %p336 = scmp.lt.s32.totalorder %s330, 97
        %s337 = scalar_select %p336, %s330, 97
        %s338 = smul.addr %s337, 2
        %s339 = smul.addr %s338, 4
        %s340 = scalar_lea.vmem %s1, %s339
        %p341 = pneg %p66
        %p342 = pneg %p63
        %s343 = smul.u32 64, %s24
        %s344 = ssub.s32 98, %s343
        %p345 = scmp.lt.s32.totalorder %s344, 64
        %s346 = scalar_select %p345, %s344, 64
        %s347 = smul.u32 64, %s346
        %p348 = scmp.lt.s32.totalorder %s343, 97
        %s349 = scalar_select %p348, %s343, 97
        %s350 = smul.addr %s349, 4
        %s351 = scalar_lea.vmem %s2, %s350
        %p352 = pneg %p92
        %p353 = pneg %p89
        %p354 = pneg %p113
        %p355 = pneg %p110
        %p356 = pneg %p134
        %p357 = pneg %p131
        %p358 = pneg %p155
        %p359 = pneg %p152
        %p360 = pneg %p176
        %p361 = pneg %p173
        %p362 = pneg %p197
        %p363 = pneg %p194
        %p364 = pneg %p218
        %p365 = pneg %p215
        %p366 = pneg %p244
        %p367 = pneg %p241
        %s368 = sand.u32 %s231, 1
        %s369 = scalar_lea.sflag [#allocation4], %s368
        %s370 = sand.u32 %s231, 1
        %s371 = smul.addr %s370, 256
        %s372 = scalar_lea.vmem [#allocation3], %s371
        %s373 = smul.u32 64, %s24
        %s374 = ssub.s32 98, %s373
        %p375 = scmp.lt.s32.totalorder %s374, 64
        %s376 = scalar_select %p375, %s374, 64
        %s377 = smul.u32 64, %s376
        %s378 = smul.u32 %s377, 2
        %p379 = scmp.lt.s32.totalorder %s373, 97
        %s380 = scalar_select %p379, %s373, 97
        %s381 = smul.addr %s380, 2
        %s382 = smul.addr %s381, 4
        %s383 = scalar_lea.vmem %s1, %s382
        %s384 = smul.u32 64, %s24
        %s385 = ssub.s32 98, %s384
        %p386 = scmp.lt.s32.totalorder %s385, 64
        %s387 = scalar_select %p386, %s385, 64
        %s388 = smul.u32 64, %s387
        %s389 = smul.u32 %s388, 2
        %s390 = smul.u32 64, %s24
        %s391 = ssub.s32 98, %s390
        %p392 = scmp.lt.s32.totalorder %s391, 64
        %s393 = scalar_select %p392, %s391, 64
        %s394 = smul.u32 64, %s393
        %p395 = scmp.lt.s32.totalorder %s390, 97
        %s396 = scalar_select %p395, %s390, 97
        %s397 = smul.addr %s396, 4
        %s398 = scalar_lea.vmem %s2, %s397
        %s399 = smul.u32 64, %s24
        %s400 = ssub.s32 98, %s399
        %p401 = scmp.lt.s32.totalorder %s400, 64
        %s402 = scalar_select %p401, %s400, 64
        %s403 = smul.u32 64, %s402
        %s404 = smul.u32 64, %s24
        %s405 = ssub.s32 98, %s404
        %p406 = scmp.lt.s32.totalorder %s405, 64
        %s407 = scalar_select %p406, %s405, 64
        %s408 = smul.u32 64, %s407
        %s410 = sld [smem:[#allocation2]]
        %v411 = vld [vmem:[%s383] sm:$0xff]
        %v412 = vld [vmem:[%s383 + $0x8] sm:$0xff]
        %v413 = vld [vmem:[%s383 + $0x10] sm:$0xff]
        %v414 = vld [vmem:[%s383 + $0x18] sm:$0xff]
        %v415 = vld [vmem:[%s383 + $0x20] sm:$0xff]
        %v416 = vld [vmem:[%s383 + $0x28] sm:$0xff]
        %v417 = vld [vmem:[%s383 + $0x30] sm:$0xff]
        %v418 = vld [vmem:[%s383 + $0x38] sm:$0xff]
        %v419 = vld [vmem:[%s383 + $0x40] sm:$0xff]
        %v420 = vld [vmem:[%s383 + $0x48] sm:$0xff]
        %v421 = vld [vmem:[%s383 + $0x50] sm:$0xff]
        %v422 = vld [vmem:[%s383 + $0x58] sm:$0xff]
        %v423 = vld [vmem:[%s383 + $0x60] sm:$0xff]
        %v424 = vld [vmem:[%s383 + $0x68] sm:$0xff]
        %v425 = vld [vmem:[%s383 + $0x70] sm:$0xff]
        %v426 = vld [vmem:[%s383 + $0x78] sm:$0xff]
        %v427 = vld [vmem:[%s383 + $0x80] sm:$0xff]
        %v428 = vld [vmem:[%s383 + $0x88] sm:$0xff]
        %v429 = vld [vmem:[%s383 + $0x90] sm:$0xff]
        %v430 = vld [vmem:[%s383 + $0x98] sm:$0xff]
        %v431 = vld [vmem:[%s383 + $0xa0] sm:$0xff]
        %v432 = vld [vmem:[%s383 + $0xa8] sm:$0xff]
        %v433 = vld [vmem:[%s383 + $0xb0] sm:$0xff]
        %v434 = vld [vmem:[%s383 + $0xb8] sm:$0xff]
        %v435 = vld [vmem:[%s383 + $0xc0] sm:$0xff]
        %v436 = vld [vmem:[%s383 + $0xc8] sm:$0xff]
        %v437 = vld [vmem:[%s383 + $0xd0] sm:$0xff]
        %v438 = vld [vmem:[%s383 + $0xd8] sm:$0xff]
        %v439 = vld [vmem:[%s383 + $0xe0] sm:$0xff]
        %v440 = vld [vmem:[%s383 + $0xe8] sm:$0xff]
        %v441 = vld [vmem:[%s383 + $0xf0] sm:$0xff]
        %v442 = vld [vmem:[%s383 + $0xf8] sm:$0xff]
        %v443 = vld [vmem:[%s383 + $0x100] sm:$0xff]
        %v444 = vld [vmem:[%s383 + $0x108] sm:$0xff]
        %v445 = vld [vmem:[%s383 + $0x110] sm:$0xff]
        %v446 = vld [vmem:[%s383 + $0x118] sm:$0xff]
        %v447 = vld [vmem:[%s383 + $0x120] sm:$0xff]
        %v448 = vld [vmem:[%s383 + $0x128] sm:$0xff]
        %v449 = vld [vmem:[%s383 + $0x130] sm:$0xff]
        %v450 = vld [vmem:[%s383 + $0x138] sm:$0xff]
        %v451 = vld [vmem:[%s383 + $0x140] sm:$0xff]
        %v452 = vld [vmem:[%s383 + $0x148] sm:$0xff]
        %v453 = vld [vmem:[%s383 + $0x150] sm:$0xff]
        %v454 = vld [vmem:[%s383 + $0x158] sm:$0xff]
        %v455 = vld [vmem:[%s383 + $0x160] sm:$0xff]
        %v456 = vld [vmem:[%s383 + $0x168] sm:$0xff]
        %v457 = vld [vmem:[%s383 + $0x170] sm:$0xff]
        %v458 = vld [vmem:[%s383 + $0x178] sm:$0xff]
        %v459 = vld [vmem:[%s383 + $0x180] sm:$0xff]
        %v460 = vld [vmem:[%s383 + $0x188] sm:$0xff]
        %v461 = vld [vmem:[%s383 + $0x190] sm:$0xff]
        %v462 = vld [vmem:[%s383 + $0x198] sm:$0xff]
        %v463 = vld [vmem:[%s383 + $0x1a0] sm:$0xff]
        %v464 = vld [vmem:[%s383 + $0x1a8] sm:$0xff]
        %v465 = vld [vmem:[%s383 + $0x1b0] sm:$0xff]
        %v466 = vld [vmem:[%s383 + $0x1b8] sm:$0xff]
        %v467 = vld [vmem:[%s383 + $0x1c0] sm:$0xff]
        %v468 = vld [vmem:[%s383 + $0x1c8] sm:$0xff]
        %v469 = vld [vmem:[%s383 + $0x1d0] sm:$0xff]
        %v470 = vld [vmem:[%s383 + $0x1d8] sm:$0xff]
        %v471 = vld [vmem:[%s383 + $0x1e0] sm:$0xff]
        %v472 = vld [vmem:[%s383 + $0x1e8] sm:$0xff]
        %v473 = vld [vmem:[%s383 + $0x1f0] sm:$0xff]
        %v474 = vld [vmem:[%s383 + $0x1f8] sm:$0xff]
        %v475 = vld [vmem:[%s3] sm:$0xf]
        %v476 = vld [vmem:[%s3 + $0x4] sm:$0xf]
        %v477 = vld [vmem:[%s3 + $0x8] sm:$0xf]
        %v478 = vld [vmem:[%s3 + $0xc] sm:$0xf]
        %v479 = vld [vmem:[%s3 + $0x10] sm:$0xf]
        %v480 = vld [vmem:[%s3 + $0x14] sm:$0xf]
        %v481 = vld [vmem:[%s3 + $0x18] sm:$0xf]
        %v482 = vld [vmem:[%s3 + $0x1c] sm:$0xf]
        %v483 = vld [vmem:[%s3 + $0x20] sm:$0xf]
        %v484 = vld [vmem:[%s3 + $0x24] sm:$0xf]
        %v485 = vld [vmem:[%s3 + $0x28] sm:$0xf]
        %v486 = vld [vmem:[%s3 + $0x2c] sm:$0xf]
        %v487 = vld [vmem:[%s3 + $0x30] sm:$0xf]
        %v488 = vld [vmem:[%s3 + $0x34] sm:$0xf]
        %v489 = vld [vmem:[%s3 + $0x38] sm:$0xf]
        %v490 = vld [vmem:[%s3 + $0x3c] sm:$0xf]
        %v491 = vld [vmem:[%s3 + $0x40] sm:$0xf]
        %v492 = vld [vmem:[%s3 + $0x44] sm:$0xf]
        %v493 = vld [vmem:[%s3 + $0x48] sm:$0xf]
        %v494 = vld [vmem:[%s3 + $0x4c] sm:$0xf]
        %v495 = vld [vmem:[%s3 + $0x50] sm:$0xf]
        %v496 = vld [vmem:[%s3 + $0x54] sm:$0xf]
        %v497 = vld [vmem:[%s3 + $0x58] sm:$0xf]
        %v498 = vld [vmem:[%s3 + $0x5c] sm:$0xf]
        %v499 = vld [vmem:[%s4] sm:$0x1]
        %v501 = vlaneseq
        %v502 = vshrl.u32 %v501, 7
        %v503 = vsub.s32 0, %v502
        %v504 = vrot.slane %v499, %v503
        %v570 = vunpack.c.l.b16 %v411
        %v571 = vunpack.c.h.b16 %v411
        %v572 = vunpack.c.l.b16 %v412
        %v573 = vunpack.c.h.b16 %v412
        %v574 = vunpack.c.l.b16 %v413
        %v575 = vunpack.c.h.b16 %v413
        %v576 = vunpack.c.l.b16 %v414
        %v577 = vunpack.c.h.b16 %v414
        %v578 = vunpack.c.l.b16 %v415
        %v579 = vunpack.c.h.b16 %v415
        %v580 = vunpack.c.l.b16 %v416
        %v581 = vunpack.c.h.b16 %v416
        %v582 = vunpack.c.l.b16 %v417
        %v583 = vunpack.c.h.b16 %v417
        %v584 = vunpack.c.l.b16 %v418
        %v585 = vunpack.c.h.b16 %v418
        %v586 = vunpack.c.l.b16 %v419
        %v587 = vunpack.c.h.b16 %v419
        %v588 = vunpack.c.l.b16 %v420
        %v589 = vunpack.c.h.b16 %v420
        %v590 = vunpack.c.l.b16 %v421
        %v591 = vunpack.c.h.b16 %v421
        %v592 = vunpack.c.l.b16 %v422
        %v593 = vunpack.c.h.b16 %v422
        %v594 = vunpack.c.l.b16 %v423
        %v595 = vunpack.c.h.b16 %v423
        %v596 = vunpack.c.l.b16 %v424
        %v597 = vunpack.c.h.b16 %v424
        %v598 = vunpack.c.l.b16 %v425
        %v599 = vunpack.c.h.b16 %v425
        %v600 = vunpack.c.l.b16 %v426
        %v601 = vunpack.c.h.b16 %v426
        %v602 = vunpack.c.l.b16 %v427
        %v603 = vunpack.c.h.b16 %v427
        %v604 = vunpack.c.l.b16 %v428
        %v605 = vunpack.c.h.b16 %v428
        %v606 = vunpack.c.l.b16 %v429
        %v607 = vunpack.c.h.b16 %v429
        %v608 = vunpack.c.l.b16 %v430
        %v609 = vunpack.c.h.b16 %v430
        %v610 = vunpack.c.l.b16 %v431
        %v611 = vunpack.c.h.b16 %v431
        %v612 = vunpack.c.l.b16 %v432
        %v613 = vunpack.c.h.b16 %v432
        %v614 = vunpack.c.l.b16 %v433
        %v615 = vunpack.c.h.b16 %v433
        %v616 = vunpack.c.l.b16 %v434
        %v617 = vunpack.c.h.b16 %v434
        %v618 = vunpack.c.l.b16 %v435
        %v619 = vunpack.c.h.b16 %v435
        %v620 = vunpack.c.l.b16 %v436
        %v621 = vunpack.c.h.b16 %v436
        %v622 = vunpack.c.l.b16 %v437
        %v623 = vunpack.c.h.b16 %v437
        %v624 = vunpack.c.l.b16 %v438
        %v625 = vunpack.c.h.b16 %v438
        %v626 = vunpack.c.l.b16 %v439
        %v627 = vunpack.c.h.b16 %v439
        %v628 = vunpack.c.l.b16 %v440
        %v629 = vunpack.c.h.b16 %v440
        %v630 = vunpack.c.l.b16 %v441
        %v631 = vunpack.c.h.b16 %v441
        %v632 = vunpack.c.l.b16 %v442
        %v633 = vunpack.c.h.b16 %v442
        %v634 = vunpack.c.l.b16 %v443
        %v635 = vunpack.c.h.b16 %v443
        %v636 = vunpack.c.l.b16 %v444
        %v637 = vunpack.c.h.b16 %v444
        %v638 = vunpack.c.l.b16 %v445
        %v639 = vunpack.c.h.b16 %v445
        %v640 = vunpack.c.l.b16 %v446
        %v641 = vunpack.c.h.b16 %v446
        %v642 = vunpack.c.l.b16 %v447
        %v643 = vunpack.c.h.b16 %v447
        %v644 = vunpack.c.l.b16 %v448
        %v645 = vunpack.c.h.b16 %v448
        %v646 = vunpack.c.l.b16 %v449
        %v647 = vunpack.c.h.b16 %v449
        %v648 = vunpack.c.l.b16 %v450
        %v649 = vunpack.c.h.b16 %v450
        %v650 = vunpack.c.l.b16 %v451
        %v651 = vunpack.c.h.b16 %v451
        %v652 = vunpack.c.l.b16 %v452
        %v653 = vunpack.c.h.b16 %v452
        %v654 = vunpack.c.l.b16 %v453
        %v655 = vunpack.c.h.b16 %v453
        %v656 = vunpack.c.l.b16 %v454
        %v657 = vunpack.c.h.b16 %v454
        %v658 = vunpack.c.l.b16 %v455
        %v659 = vunpack.c.h.b16 %v455
        %v660 = vunpack.c.l.b16 %v456
        %v661 = vunpack.c.h.b16 %v456
        %v662 = vunpack.c.l.b16 %v457
        %v663 = vunpack.c.h.b16 %v457
        %v664 = vunpack.c.l.b16 %v458
        %v665 = vunpack.c.h.b16 %v458
        %v666 = vunpack.c.l.b16 %v459
        %v667 = vunpack.c.h.b16 %v459
        %v668 = vunpack.c.l.b16 %v460
        %v669 = vunpack.c.h.b16 %v460
        %v670 = vunpack.c.l.b16 %v461
        %v671 = vunpack.c.h.b16 %v461
        %v672 = vunpack.c.l.b16 %v462
        %v673 = vunpack.c.h.b16 %v462
        %v674 = vunpack.c.l.b16 %v463
        %v675 = vunpack.c.h.b16 %v463
        %v676 = vunpack.c.l.b16 %v464
        %v677 = vunpack.c.h.b16 %v464
        %v678 = vunpack.c.l.b16 %v465
        %v679 = vunpack.c.h.b16 %v465
        %v680 = vunpack.c.l.b16 %v466
        %v681 = vunpack.c.h.b16 %v466
        %v682 = vunpack.c.l.b16 %v467
        %v683 = vunpack.c.h.b16 %v467
        %v684 = vunpack.c.l.b16 %v468
        %v685 = vunpack.c.h.b16 %v468
        %v686 = vunpack.c.l.b16 %v469
        %v687 = vunpack.c.h.b16 %v469
        %v688 = vunpack.c.l.b16 %v470
        %v689 = vunpack.c.h.b16 %v470
        %v690 = vunpack.c.l.b16 %v471
        %v691 = vunpack.c.h.b16 %v471
        %v692 = vunpack.c.l.b16 %v472
        %v693 = vunpack.c.h.b16 %v472
        %v694 = vunpack.c.l.b16 %v473
        %v695 = vunpack.c.h.b16 %v473
        %v696 = vunpack.c.l.b16 %v474
        %v697 = vunpack.c.h.b16 %v474
        %v698 = vpack.c.b16 %v572, %v570
        %v699 = vpack.c.b16 %v573, %v571
        %v700 = vpack.c.b16 %v576, %v574
        %v701 = vpack.c.b16 %v577, %v575
        %v702 = vpack.c.b16 %v580, %v578
        %v703 = vpack.c.b16 %v581, %v579
        %v704 = vpack.c.b16 %v584, %v582
        %v705 = vpack.c.b16 %v585, %v583
        %v706 = vpack.c.b16 %v588, %v586
        %v707 = vpack.c.b16 %v589, %v587
        %v708 = vpack.c.b16 %v592, %v590
        %v709 = vpack.c.b16 %v593, %v591
        %v710 = vpack.c.b16 %v596, %v594
        %v711 = vpack.c.b16 %v597, %v595
        %v712 = vpack.c.b16 %v600, %v598
        %v713 = vpack.c.b16 %v601, %v599
        %v714 = vpack.c.b16 %v604, %v602
        %v715 = vpack.c.b16 %v605, %v603
        %v716 = vpack.c.b16 %v608, %v606
        %v717 = vpack.c.b16 %v609, %v607
        %v718 = vpack.c.b16 %v612, %v610
        %v719 = vpack.c.b16 %v613, %v611
        %v720 = vpack.c.b16 %v616, %v614
        %v721 = vpack.c.b16 %v617, %v615
        %v722 = vpack.c.b16 %v620, %v618
        %v723 = vpack.c.b16 %v621, %v619
        %v724 = vpack.c.b16 %v624, %v622
        %v725 = vpack.c.b16 %v625, %v623
        %v726 = vpack.c.b16 %v628, %v626
        %v727 = vpack.c.b16 %v629, %v627
        %v728 = vpack.c.b16 %v632, %v630
        %v729 = vpack.c.b16 %v633, %v631
        %v730 = vpack.c.b16 %v636, %v634
        %v731 = vpack.c.b16 %v637, %v635
        %v732 = vpack.c.b16 %v640, %v638
        %v733 = vpack.c.b16 %v641, %v639
        %v734 = vpack.c.b16 %v644, %v642
        %v735 = vpack.c.b16 %v645, %v643
        %v736 = vpack.c.b16 %v648, %v646
        %v737 = vpack.c.b16 %v649, %v647
        %v738 = vpack.c.b16 %v652, %v650
        %v739 = vpack.c.b16 %v653, %v651
        %v740 = vpack.c.b16 %v656, %v654
        %v741 = vpack.c.b16 %v657, %v655
        %v742 = vpack.c.b16 %v660, %v658
        %v743 = vpack.c.b16 %v661, %v659
        %v744 = vpack.c.b16 %v664, %v662
        %v745 = vpack.c.b16 %v665, %v663
        %v746 = vpack.c.b16 %v668, %v666
        %v747 = vpack.c.b16 %v669, %v667
        %v748 = vpack.c.b16 %v672, %v670
        %v749 = vpack.c.b16 %v673, %v671
        %v750 = vpack.c.b16 %v676, %v674
        %v751 = vpack.c.b16 %v677, %v675
        %v752 = vpack.c.b16 %v680, %v678
        %v753 = vpack.c.b16 %v681, %v679
        %v754 = vpack.c.b16 %v684, %v682
        %v755 = vpack.c.b16 %v685, %v683
        %v756 = vpack.c.b16 %v688, %v686
        %v757 = vpack.c.b16 %v689, %v687
        %v758 = vpack.c.b16 %v692, %v690
        %v759 = vpack.c.b16 %v693, %v691
        %v760 = vpack.c.b16 %v696, %v694
        %v761 = vpack.c.b16 %v697, %v695
        %v818 = vunpack.c.l.b16 %v475
        %v819 = vunpack.c.l.b16 %v476
        %v820 = vunpack.c.l.b16 %v477
        %v821 = vunpack.c.l.b16 %v478
        %v822 = vunpack.c.l.b16 %v479
        %v823 = vunpack.c.l.b16 %v480
        %v824 = vunpack.c.l.b16 %v481
        %v825 = vunpack.c.l.b16 %v482
        %v826 = vunpack.c.l.b16 %v483
        %v827 = vunpack.c.l.b16 %v484
        %v828 = vunpack.c.l.b16 %v485
        %v829 = vunpack.c.l.b16 %v486
        %v830 = vunpack.c.l.b16 %v487
        %v831 = vunpack.c.l.b16 %v488
        %v832 = vunpack.c.l.b16 %v489
        %v833 = vunpack.c.l.b16 %v490
        %v834 = vunpack.c.l.b16 %v491
        %v835 = vunpack.c.l.b16 %v492
        %v836 = vunpack.c.l.b16 %v493
        %v837 = vunpack.c.l.b16 %v494
        %v838 = vunpack.c.l.b16 %v495
        %v839 = vunpack.c.l.b16 %v496
        %v840 = vunpack.c.l.b16 %v497
        %v841 = vunpack.c.l.b16 %v498
        %v842 = vpack.c.b16 %v819, %v818
        %v843 = vpack.c.b16 %v821, %v820
        %v844 = vpack.c.b16 %v823, %v822
        %v845 = vpack.c.b16 %v825, %v824
        %v846 = vpack.c.b16 %v827, %v826
        %v847 = vpack.c.b16 %v829, %v828
        %v848 = vpack.c.b16 %v831, %v830
        %v849 = vpack.c.b16 %v833, %v832
        %v850 = vpack.c.b16 %v835, %v834
        %v851 = vpack.c.b16 %v837, %v836
        %v852 = vpack.c.b16 %v839, %v838
        %v853 = vpack.c.b16 %v841, %v840
        %vm866 = vcmask 523264
        %v868 = vsel %vm866, %v699, 0
        %v871 = vsel %vm866, %v701, 0
        %v874 = vsel %vm866, %v703, 0
        %v877 = vsel %vm866, %v705, 0
        %v880 = vsel %vm866, %v707, 0
        %v883 = vsel %vm866, %v709, 0
        %v886 = vsel %vm866, %v711, 0
        %v889 = vsel %vm866, %v713, 0
        %v892 = vsel %vm866, %v715, 0
        %v895 = vsel %vm866, %v717, 0
        %v898 = vsel %vm866, %v719, 0
        %v901 = vsel %vm866, %v721, 0
        %v904 = vsel %vm866, %v723, 0
        %v907 = vsel %vm866, %v725, 0
        %v910 = vsel %vm866, %v727, 0
        %v913 = vsel %vm866, %v729, 0
        %v916 = vsel %vm866, %v731, 0
        %v919 = vsel %vm866, %v733, 0
        %v922 = vsel %vm866, %v735, 0
        %v925 = vsel %vm866, %v737, 0
        %v928 = vsel %vm866, %v739, 0
        %v931 = vsel %vm866, %v741, 0
        %v934 = vsel %vm866, %v743, 0
        %v937 = vsel %vm866, %v745, 0
        %v940 = vsel %vm866, %v747, 0
        %v943 = vsel %vm866, %v749, 0
        %v946 = vsel %vm866, %v751, 0
        %v949 = vsel %vm866, %v753, 0
        %v952 = vsel %vm866, %v755, 0
        %v955 = vsel %vm866, %v757, 0
        %v958 = vsel %vm866, %v759, 0
        %v961 = vsel %vm866, %v761, 0
        %963 = vmatprep.subr.bf16.mxu0 0
        %964 = vmatpush1.bf16.msra.mxu0 %v849
        %965 = vmatprep.subr.bf16.mxu0 0
        %966 = vmatpush1.bf16.msra.mxu0 %v848
        %967 = vmatprep.subr.bf16.mxu0 0
        %968 = vmatpush1.bf16.msra.mxu0 %v847
        %969 = vmatprep.subr.bf16.mxu0 0
        %970 = vmatpush1.bf16.msra.mxu0 %v846
        %971 = vmatprep.subr.bf16.mxu0 0
        %972 = vmatpush1.bf16.msra.mxu0 %v845
        %973 = vmatprep.subr.bf16.mxu0 0
        %974 = vmatpush1.bf16.msra.mxu0 %v844
        %975 = vmatprep.subr.bf16.mxu0 0
        %976 = vmatpush1.bf16.msra.mxu0 %v843
        %977 = vmatprep.subr.bf16.mxu0 0
        %978 = vmatpush1.bf16.msra.mxu0 %v842
        %979 = vmatprep.subr.bf16.mxu0 0
        %980 = vmatpush2.bf16.msra.mxu0 0
        %981 = vmatprep.subr.bf16.mxu0 0
        %982 = vmatpush2.bf16.msra.mxu0 0
        %983 = vmatprep.subr.bf16.mxu0 0
        %984 = vmatpush2.bf16.msra.mxu0 0
        %985 = vmatprep.subr.bf16.mxu0 0
        %986 = vmatpush2.bf16.msra.mxu0 0
        %987 = vmatprep.subr.bf16.mxu0 0
        %988 = vmatpush2.bf16.msra.mxu0 %v853
        %989 = vmatprep.subr.bf16.mxu0 0
        %990 = vmatpush2.bf16.msra.mxu0 %v852
        %991 = vmatprep.subr.bf16.mxu0 0
        %992 = vmatpush2.bf16.msra.mxu0 %v851
        %993 = vmatprep.subr.bf16.mxu0 0
        %994 = vmatpush2.bf16.msra.mxu0 %v850
        %995 = vmatprep.mubr.bf16.mxu0 %v868
        %996 = vmatmul.mubr.bf16.gmra.mxu0 %v698
        %v997 = vpop.f32.mrf.mxu0
        %v998 = vadd.f32 %v504, %v997
        %v999 = vpop.f32.mrf.mxu0
        %v1000 = vpop.f32.mrf.mxu0
        %v1001 = vadd.f32 %v504, %v1000
        %v1002 = vpop.f32.mrf.mxu0
        %1003 = vmatprep.mubr.bf16.mxu0 %v871
        %1004 = vmatmul.mubr.bf16.gmra.mxu0 %v700
        %v1005 = vpop.f32.mrf.mxu0
        %v1006 = vadd.f32 %v504, %v1005
        %v1007 = vpop.f32.mrf.mxu0
        %v1008 = vpop.f32.mrf.mxu0
        %v1009 = vadd.f32 %v504, %v1008
        %v1010 = vpop.f32.mrf.mxu0
        %1011 = vmatprep.mubr.bf16.mxu0 %v874
        %1012 = vmatmul.mubr.bf16.gmra.mxu0 %v702
        %v1013 = vpop.f32.mrf.mxu0
        %v1014 = vadd.f32 %v504, %v1013
        %v1015 = vpop.f32.mrf.mxu0
        %v1016 = vpop.f32.mrf.mxu0
        %v1017 = vadd.f32 %v504, %v1016
        %v1018 = vpop.f32.mrf.mxu0
        %1019 = vmatprep.mubr.bf16.mxu0 %v877
        %1020 = vmatmul.mubr.bf16.gmra.mxu0 %v704
        %v1021 = vpop.f32.mrf.mxu0
        %v1022 = vadd.f32 %v504, %v1021
        %v1023 = vpop.f32.mrf.mxu0
        %v1024 = vpop.f32.mrf.mxu0
        %v1025 = vadd.f32 %v504, %v1024
        %v1026 = vpop.f32.mrf.mxu0
        %1027 = vmatprep.mubr.bf16.mxu0 %v880
        %1028 = vmatmul.mubr.bf16.gmra.mxu0 %v706
        %v1029 = vpop.f32.mrf.mxu0
        %v1030 = vadd.f32 %v504, %v1029
        %v1031 = vpop.f32.mrf.mxu0
        %v1032 = vpop.f32.mrf.mxu0
        %v1033 = vadd.f32 %v504, %v1032
        %v1034 = vpop.f32.mrf.mxu0
        %1035 = vmatprep.mubr.bf16.mxu0 %v883
        %1036 = vmatmul.mubr.bf16.gmra.mxu0 %v708
        %v1037 = vpop.f32.mrf.mxu0
        %v1038 = vadd.f32 %v504, %v1037
        %v1039 = vpop.f32.mrf.mxu0
        %v1040 = vpop.f32.mrf.mxu0
        %v1041 = vadd.f32 %v504, %v1040
        %v1042 = vpop.f32.mrf.mxu0
        %1043 = vmatprep.mubr.bf16.mxu0 %v886
        %1044 = vmatmul.mubr.bf16.gmra.mxu0 %v710
        %v1045 = vpop.f32.mrf.mxu0
        %v1046 = vadd.f32 %v504, %v1045
        %v1047 = vpop.f32.mrf.mxu0
        %v1048 = vpop.f32.mrf.mxu0
        %v1049 = vadd.f32 %v504, %v1048
        %v1050 = vpop.f32.mrf.mxu0
        %1051 = vmatprep.mubr.bf16.mxu0 %v889
        %1052 = vmatmul.mubr.bf16.gmra.mxu0 %v712
        %v1053 = vpop.f32.mrf.mxu0
        %v1054 = vadd.f32 %v504, %v1053
        %v1055 = vpop.f32.mrf.mxu0
        %v1056 = vpop.f32.mrf.mxu0
        %v1057 = vadd.f32 %v504, %v1056
        %v1058 = vpop.f32.mrf.mxu0
        %1059 = vmatprep.mubr.bf16.mxu0 %v892
        %1060 = vmatmul.mubr.bf16.gmra.mxu0 %v714
        %v1061 = vpop.f32.mrf.mxu0
        %v1062 = vadd.f32 %v504, %v1061
        %v1063 = vpop.f32.mrf.mxu0
        %v1064 = vpop.f32.mrf.mxu0
        %v1065 = vadd.f32 %v504, %v1064
        %v1066 = vpop.f32.mrf.mxu0
        %1067 = vmatprep.mubr.bf16.mxu0 %v895
        %1068 = vmatmul.mubr.bf16.gmra.mxu0 %v716
        %v1069 = vpop.f32.mrf.mxu0
        %v1070 = vadd.f32 %v504, %v1069
        %v1071 = vpop.f32.mrf.mxu0
        %v1072 = vpop.f32.mrf.mxu0
        %v1073 = vadd.f32 %v504, %v1072
        %v1074 = vpop.f32.mrf.mxu0
        %1075 = vmatprep.mubr.bf16.mxu0 %v898
        %1076 = vmatmul.mubr.bf16.gmra.mxu0 %v718
        %v1077 = vpop.f32.mrf.mxu0
        %v1078 = vadd.f32 %v504, %v1077
        %v1079 = vpop.f32.mrf.mxu0
        %v1080 = vpop.f32.mrf.mxu0
        %v1081 = vadd.f32 %v504, %v1080
        %v1082 = vpop.f32.mrf.mxu0
        %1083 = vmatprep.mubr.bf16.mxu0 %v901
        %1084 = vmatmul.mubr.bf16.gmra.mxu0 %v720
        %v1085 = vpop.f32.mrf.mxu0
        %v1086 = vadd.f32 %v504, %v1085
        %v1087 = vpop.f32.mrf.mxu0
        %v1088 = vpop.f32.mrf.mxu0
        %v1089 = vadd.f32 %v504, %v1088
        %v1090 = vpop.f32.mrf.mxu0
        %1091 = vmatprep.mubr.bf16.mxu0 %v904
        %1092 = vmatmul.mubr.bf16.gmra.mxu0 %v722
        %v1093 = vpop.f32.mrf.mxu0
        %v1094 = vadd.f32 %v504, %v1093
        %v1095 = vpop.f32.mrf.mxu0
        %v1096 = vpop.f32.mrf.mxu0
        %v1097 = vadd.f32 %v504, %v1096
        %v1098 = vpop.f32.mrf.mxu0
        %1099 = vmatprep.mubr.bf16.mxu0 %v907
        %1100 = vmatmul.mubr.bf16.gmra.mxu0 %v724
        %v1101 = vpop.f32.mrf.mxu0
        %v1102 = vadd.f32 %v504, %v1101
        %v1103 = vpop.f32.mrf.mxu0
        %v1104 = vpop.f32.mrf.mxu0
        %v1105 = vadd.f32 %v504, %v1104
        %v1106 = vpop.f32.mrf.mxu0
        %1107 = vmatprep.mubr.bf16.mxu0 %v910
        %1108 = vmatmul.mubr.bf16.gmra.mxu0 %v726
        %v1109 = vpop.f32.mrf.mxu0
        %v1110 = vadd.f32 %v504, %v1109
        %v1111 = vpop.f32.mrf.mxu0
        %v1112 = vpop.f32.mrf.mxu0
        %v1113 = vadd.f32 %v504, %v1112
        %v1114 = vpop.f32.mrf.mxu0
        %1115 = vmatprep.mubr.bf16.mxu0 %v913
        %1116 = vmatmul.mubr.bf16.gmra.mxu0 %v728
        %v1117 = vpop.f32.mrf.mxu0
        %v1118 = vadd.f32 %v504, %v1117
        %v1119 = vpop.f32.mrf.mxu0
        %v1120 = vpop.f32.mrf.mxu0
        %v1121 = vadd.f32 %v504, %v1120
        %v1122 = vpop.f32.mrf.mxu0
        %1123 = vmatprep.mubr.bf16.mxu0 %v916
        %1124 = vmatmul.mubr.bf16.gmra.mxu0 %v730
        %v1125 = vpop.f32.mrf.mxu0
        %v1126 = vadd.f32 %v504, %v1125
        %v1127 = vpop.f32.mrf.mxu0
        %v1128 = vpop.f32.mrf.mxu0
        %v1129 = vadd.f32 %v504, %v1128
        %v1130 = vpop.f32.mrf.mxu0
        %1131 = vmatprep.mubr.bf16.mxu0 %v919
        %1132 = vmatmul.mubr.bf16.gmra.mxu0 %v732
        %v1133 = vpop.f32.mrf.mxu0
        %v1134 = vadd.f32 %v504, %v1133
        %v1135 = vpop.f32.mrf.mxu0
        %v1136 = vpop.f32.mrf.mxu0
        %v1137 = vadd.f32 %v504, %v1136
        %v1138 = vpop.f32.mrf.mxu0
        %1139 = vmatprep.mubr.bf16.mxu0 %v922
        %1140 = vmatmul.mubr.bf16.gmra.mxu0 %v734
        %v1141 = vpop.f32.mrf.mxu0
        %v1142 = vadd.f32 %v504, %v1141
        %v1143 = vpop.f32.mrf.mxu0
        %v1144 = vpop.f32.mrf.mxu0
        %v1145 = vadd.f32 %v504, %v1144
        %v1146 = vpop.f32.mrf.mxu0
        %1147 = vmatprep.mubr.bf16.mxu0 %v925
        %1148 = vmatmul.mubr.bf16.gmra.mxu0 %v736
        %v1149 = vpop.f32.mrf.mxu0
        %v1150 = vadd.f32 %v504, %v1149
        %v1151 = vpop.f32.mrf.mxu0
        %v1152 = vpop.f32.mrf.mxu0
        %v1153 = vadd.f32 %v504, %v1152
        %v1154 = vpop.f32.mrf.mxu0
        %1155 = vmatprep.mubr.bf16.mxu0 %v928
        %1156 = vmatmul.mubr.bf16.gmra.mxu0 %v738
        %v1157 = vpop.f32.mrf.mxu0
        %v1158 = vadd.f32 %v504, %v1157
        %v1159 = vpop.f32.mrf.mxu0
        %v1160 = vpop.f32.mrf.mxu0
        %v1161 = vadd.f32 %v504, %v1160
        %v1162 = vpop.f32.mrf.mxu0
        %1163 = vmatprep.mubr.bf16.mxu0 %v931
        %1164 = vmatmul.mubr.bf16.gmra.mxu0 %v740
        %v1165 = vpop.f32.mrf.mxu0
        %v1166 = vadd.f32 %v504, %v1165
        %v1167 = vpop.f32.mrf.mxu0
        %v1168 = vpop.f32.mrf.mxu0
        %v1169 = vadd.f32 %v504, %v1168
        %v1170 = vpop.f32.mrf.mxu0
        %1171 = vmatprep.mubr.bf16.mxu0 %v934
        %1172 = vmatmul.mubr.bf16.gmra.mxu0 %v742
        %v1173 = vpop.f32.mrf.mxu0
        %v1174 = vadd.f32 %v504, %v1173
        %v1175 = vpop.f32.mrf.mxu0
        %v1176 = vpop.f32.mrf.mxu0
        %v1177 = vadd.f32 %v504, %v1176
        %v1178 = vpop.f32.mrf.mxu0
        %1179 = vmatprep.mubr.bf16.mxu0 %v937
        %1180 = vmatmul.mubr.bf16.gmra.mxu0 %v744
        %v1181 = vpop.f32.mrf.mxu0
        %v1182 = vadd.f32 %v504, %v1181
        %v1183 = vpop.f32.mrf.mxu0
        %v1184 = vpop.f32.mrf.mxu0
        %v1185 = vadd.f32 %v504, %v1184
        %v1186 = vpop.f32.mrf.mxu0
        %1187 = vmatprep.mubr.bf16.mxu0 %v940
        %1188 = vmatmul.mubr.bf16.gmra.mxu0 %v746
        %v1189 = vpop.f32.mrf.mxu0
        %v1190 = vadd.f32 %v504, %v1189
        %v1191 = vpop.f32.mrf.mxu0
        %v1192 = vpop.f32.mrf.mxu0
        %v1193 = vadd.f32 %v504, %v1192
        %v1194 = vpop.f32.mrf.mxu0
        %1195 = vmatprep.mubr.bf16.mxu0 %v943
        %1196 = vmatmul.mubr.bf16.gmra.mxu0 %v748
        %v1197 = vpop.f32.mrf.mxu0
        %v1198 = vadd.f32 %v504, %v1197
        %v1199 = vpop.f32.mrf.mxu0
        %v1200 = vpop.f32.mrf.mxu0
        %v1201 = vadd.f32 %v504, %v1200
        %v1202 = vpop.f32.mrf.mxu0
        %1203 = vmatprep.mubr.bf16.mxu0 %v946
        %1204 = vmatmul.mubr.bf16.gmra.mxu0 %v750
        %v1205 = vpop.f32.mrf.mxu0
        %v1206 = vadd.f32 %v504, %v1205
        %v1207 = vpop.f32.mrf.mxu0
        %v1208 = vpop.f32.mrf.mxu0
        %v1209 = vadd.f32 %v504, %v1208
        %v1210 = vpop.f32.mrf.mxu0
        %1211 = vmatprep.mubr.bf16.mxu0 %v949
        %1212 = vmatmul.mubr.bf16.gmra.mxu0 %v752
        %v1213 = vpop.f32.mrf.mxu0
        %v1214 = vadd.f32 %v504, %v1213
        %v1215 = vpop.f32.mrf.mxu0
        %v1216 = vpop.f32.mrf.mxu0
        %v1217 = vadd.f32 %v504, %v1216
        %v1218 = vpop.f32.mrf.mxu0
        %1219 = vmatprep.mubr.bf16.mxu0 %v952
        %1220 = vmatmul.mubr.bf16.gmra.mxu0 %v754
        %v1221 = vpop.f32.mrf.mxu0
        %v1222 = vadd.f32 %v504, %v1221
        %v1223 = vpop.f32.mrf.mxu0
        %v1224 = vpop.f32.mrf.mxu0
        %v1225 = vadd.f32 %v504, %v1224
        %v1226 = vpop.f32.mrf.mxu0
        %1227 = vmatprep.mubr.bf16.mxu0 %v955
        %1228 = vmatmul.mubr.bf16.gmra.mxu0 %v756
        %v1229 = vpop.f32.mrf.mxu0
        %v1230 = vadd.f32 %v504, %v1229
        %v1231 = vpop.f32.mrf.mxu0
        %v1232 = vpop.f32.mrf.mxu0
        %v1233 = vadd.f32 %v504, %v1232
        %v1234 = vpop.f32.mrf.mxu0
        %1235 = vmatprep.mubr.bf16.mxu0 %v958
        %1236 = vmatmul.mubr.bf16.gmra.mxu0 %v758
        %v1237 = vpop.f32.mrf.mxu0
        %v1238 = vadd.f32 %v504, %v1237
        %v1239 = vpop.f32.mrf.mxu0
        %v1240 = vpop.f32.mrf.mxu0
        %v1241 = vadd.f32 %v504, %v1240
        %v1242 = vpop.f32.mrf.mxu0
        %1243 = vmatprep.mubr.bf16.mxu0 %v961
        %1244 = vmatmul.mubr.bf16.gmra.mxu0 %v760
        %v1245 = vpop.f32.mrf.mxu0
        %v1246 = vadd.f32 %v504, %v1245
        %v1247 = vpop.f32.mrf.mxu0
        %v1248 = vpop.f32.mrf.mxu0
        %v1249 = vadd.f32 %v504, %v1248
        %v1250 = vpop.f32.mrf.mxu0
        %1251 = vdwg.mxu0
        %v1252 = vstv %s410
        %v1253 = vmul.f32 %v1252, %v998
        %v1254 = vmul.f32 %v1252, %v1001
        %v1255 = vmul.f32 %v1252, %v1006
        %v1256 = vmul.f32 %v1252, %v1009
        %v1257 = vmul.f32 %v1252, %v1014
        %v1258 = vmul.f32 %v1252, %v1017
        %v1259 = vmul.f32 %v1252, %v1022
        %v1260 = vmul.f32 %v1252, %v1025
        %v1261 = vmul.f32 %v1252, %v1030
        %v1262 = vmul.f32 %v1252, %v1033
        %v1263 = vmul.f32 %v1252, %v1038
        %v1264 = vmul.f32 %v1252, %v1041
        %v1265 = vmul.f32 %v1252, %v1046
        %v1266 = vmul.f32 %v1252, %v1049
        %v1267 = vmul.f32 %v1252, %v1054
        %v1268 = vmul.f32 %v1252, %v1057
        %v1269 = vmul.f32 %v1252, %v1062
        %v1270 = vmul.f32 %v1252, %v1065
        %v1271 = vmul.f32 %v1252, %v1070
        %v1272 = vmul.f32 %v1252, %v1073
        %v1273 = vmul.f32 %v1252, %v1078
        %v1274 = vmul.f32 %v1252, %v1081
        %v1275 = vmul.f32 %v1252, %v1086
        %v1276 = vmul.f32 %v1252, %v1089
        %v1277 = vmul.f32 %v1252, %v1094
        %v1278 = vmul.f32 %v1252, %v1097
        %v1279 = vmul.f32 %v1252, %v1102
        %v1280 = vmul.f32 %v1252, %v1105
        %v1281 = vmul.f32 %v1252, %v1110
        %v1282 = vmul.f32 %v1252, %v1113
        %v1283 = vmul.f32 %v1252, %v1118
        %v1284 = vmul.f32 %v1252, %v1121
        %v1285 = vmul.f32 %v1252, %v1126
        %v1286 = vmul.f32 %v1252, %v1129
        %v1287 = vmul.f32 %v1252, %v1134
        %v1288 = vmul.f32 %v1252, %v1137
        %v1289 = vmul.f32 %v1252, %v1142
        %v1290 = vmul.f32 %v1252, %v1145
        %v1291 = vmul.f32 %v1252, %v1150
        %v1292 = vmul.f32 %v1252, %v1153
        %v1293 = vmul.f32 %v1252, %v1158
        %v1294 = vmul.f32 %v1252, %v1161
        %v1295 = vmul.f32 %v1252, %v1166
        %v1296 = vmul.f32 %v1252, %v1169
        %v1297 = vmul.f32 %v1252, %v1174
        %v1298 = vmul.f32 %v1252, %v1177
        %v1299 = vmul.f32 %v1252, %v1182
        %v1300 = vmul.f32 %v1252, %v1185
        %v1301 = vmul.f32 %v1252, %v1190
        %v1302 = vmul.f32 %v1252, %v1193
        %v1303 = vmul.f32 %v1252, %v1198
        %v1304 = vmul.f32 %v1252, %v1201
        %v1305 = vmul.f32 %v1252, %v1206
        %v1306 = vmul.f32 %v1252, %v1209
        %v1307 = vmul.f32 %v1252, %v1214
        %v1308 = vmul.f32 %v1252, %v1217
        %v1309 = vmul.f32 %v1252, %v1222
        %v1310 = vmul.f32 %v1252, %v1225
        %v1311 = vmul.f32 %v1252, %v1230
        %v1312 = vmul.f32 %v1252, %v1233
        %v1313 = vmul.f32 %v1252, %v1238
        %v1314 = vmul.f32 %v1252, %v1241
        %v1315 = vmul.f32 %v1252, %v1246
        %v1316 = vmul.f32 %v1252, %v1249
        %s1317 = ssub.f32 1.0, %s410
        %v1318 = vld [vmem:[%s398] sm:$0xf]
        %v1319 = vld [vmem:[%s398 + $0x4] sm:$0xf]
        %v1320 = vld [vmem:[%s398 + $0x8] sm:$0xf]
        %v1321 = vld [vmem:[%s398 + $0xc] sm:$0xf]
        %v1322 = vld [vmem:[%s398 + $0x10] sm:$0xf]
        %v1323 = vld [vmem:[%s398 + $0x14] sm:$0xf]
        %v1324 = vld [vmem:[%s398 + $0x18] sm:$0xf]
        %v1325 = vld [vmem:[%s398 + $0x1c] sm:$0xf]
        %v1326 = vld [vmem:[%s398 + $0x20] sm:$0xf]
        %v1327 = vld [vmem:[%s398 + $0x24] sm:$0xf]
        %v1328 = vld [vmem:[%s398 + $0x28] sm:$0xf]
        %v1329 = vld [vmem:[%s398 + $0x2c] sm:$0xf]
        %v1330 = vld [vmem:[%s398 + $0x30] sm:$0xf]
        %v1331 = vld [vmem:[%s398 + $0x34] sm:$0xf]
        %v1332 = vld [vmem:[%s398 + $0x38] sm:$0xf]
        %v1333 = vld [vmem:[%s398 + $0x3c] sm:$0xf]
        %v1334 = vld [vmem:[%s398 + $0x40] sm:$0xf]
        %v1335 = vld [vmem:[%s398 + $0x44] sm:$0xf]
        %v1336 = vld [vmem:[%s398 + $0x48] sm:$0xf]
        %v1337 = vld [vmem:[%s398 + $0x4c] sm:$0xf]
        %v1338 = vld [vmem:[%s398 + $0x50] sm:$0xf]
        %v1339 = vld [vmem:[%s398 + $0x54] sm:$0xf]
        %v1340 = vld [vmem:[%s398 + $0x58] sm:$0xf]
        %v1341 = vld [vmem:[%s398 + $0x5c] sm:$0xf]
        %v1342 = vld [vmem:[%s398 + $0x60] sm:$0xf]
        %v1343 = vld [vmem:[%s398 + $0x64] sm:$0xf]
        %v1344 = vld [vmem:[%s398 + $0x68] sm:$0xf]
        %v1345 = vld [vmem:[%s398 + $0x6c] sm:$0xf]
        %v1346 = vld [vmem:[%s398 + $0x70] sm:$0xf]
        %v1347 = vld [vmem:[%s398 + $0x74] sm:$0xf]
        %v1348 = vld [vmem:[%s398 + $0x78] sm:$0xf]
        %v1349 = vld [vmem:[%s398 + $0x7c] sm:$0xf]
        %v1350 = vld [vmem:[%s398 + $0x80] sm:$0xf]
        %v1351 = vld [vmem:[%s398 + $0x84] sm:$0xf]
        %v1352 = vld [vmem:[%s398 + $0x88] sm:$0xf]
        %v1353 = vld [vmem:[%s398 + $0x8c] sm:$0xf]
        %v1354 = vld [vmem:[%s398 + $0x90] sm:$0xf]
        %v1355 = vld [vmem:[%s398 + $0x94] sm:$0xf]
        %v1356 = vld [vmem:[%s398 + $0x98] sm:$0xf]
        %v1357 = vld [vmem:[%s398 + $0x9c] sm:$0xf]
        %v1358 = vld [vmem:[%s398 + $0xa0] sm:$0xf]
        %v1359 = vld [vmem:[%s398 + $0xa4] sm:$0xf]
        %v1360 = vld [vmem:[%s398 + $0xa8] sm:$0xf]
        %v1361 = vld [vmem:[%s398 + $0xac] sm:$0xf]
        %v1362 = vld [vmem:[%s398 + $0xb0] sm:$0xf]
        %v1363 = vld [vmem:[%s398 + $0xb4] sm:$0xf]
        %v1364 = vld [vmem:[%s398 + $0xb8] sm:$0xf]
        %v1365 = vld [vmem:[%s398 + $0xbc] sm:$0xf]
        %v1366 = vld [vmem:[%s398 + $0xc0] sm:$0xf]
        %v1367 = vld [vmem:[%s398 + $0xc4] sm:$0xf]
        %v1368 = vld [vmem:[%s398 + $0xc8] sm:$0xf]
        %v1369 = vld [vmem:[%s398 + $0xcc] sm:$0xf]
        %v1370 = vld [vmem:[%s398 + $0xd0] sm:$0xf]
        %v1371 = vld [vmem:[%s398 + $0xd4] sm:$0xf]
        %v1372 = vld [vmem:[%s398 + $0xd8] sm:$0xf]
        %v1373 = vld [vmem:[%s398 + $0xdc] sm:$0xf]
        %v1374 = vld [vmem:[%s398 + $0xe0] sm:$0xf]
        %v1375 = vld [vmem:[%s398 + $0xe4] sm:$0xf]
        %v1376 = vld [vmem:[%s398 + $0xe8] sm:$0xf]
        %v1377 = vld [vmem:[%s398 + $0xec] sm:$0xf]
        %v1378 = vld [vmem:[%s398 + $0xf0] sm:$0xf]
        %v1379 = vld [vmem:[%s398 + $0xf4] sm:$0xf]
        %v1380 = vld [vmem:[%s398 + $0xf8] sm:$0xf]
        %v1381 = vld [vmem:[%s398 + $0xfc] sm:$0xf]
        %v1382 = vunpack.c.l.bf16 %v1318
        %v1383 = vunpack.c.l.bf16 %v1319
        %v1384 = vunpack.c.l.bf16 %v1320
        %v1385 = vunpack.c.l.bf16 %v1321
        %v1386 = vunpack.c.l.bf16 %v1322
        %v1387 = vunpack.c.l.bf16 %v1323
        %v1388 = vunpack.c.l.bf16 %v1324
        %v1389 = vunpack.c.l.bf16 %v1325
        %v1390 = vunpack.c.l.bf16 %v1326
        %v1391 = vunpack.c.l.bf16 %v1327
        %v1392 = vunpack.c.l.bf16 %v1328
        %v1393 = vunpack.c.l.bf16 %v1329
        %v1394 = vunpack.c.l.bf16 %v1330
        %v1395 = vunpack.c.l.bf16 %v1331
        %v1396 = vunpack.c.l.bf16 %v1332
        %v1397 = vunpack.c.l.bf16 %v1333
        %v1398 = vunpack.c.l.bf16 %v1334
        %v1399 = vunpack.c.l.bf16 %v1335
        %v1400 = vunpack.c.l.bf16 %v1336
        %v1401 = vunpack.c.l.bf16 %v1337
        %v1402 = vunpack.c.l.bf16 %v1338
        %v1403 = vunpack.c.l.bf16 %v1339
        %v1404 = vunpack.c.l.bf16 %v1340
        %v1405 = vunpack.c.l.bf16 %v1341
        %v1406 = vunpack.c.l.bf16 %v1342
        %v1407 = vunpack.c.l.bf16 %v1343
        %v1408 = vunpack.c.l.bf16 %v1344
        %v1409 = vunpack.c.l.bf16 %v1345
        %v1410 = vunpack.c.l.bf16 %v1346
        %v1411 = vunpack.c.l.bf16 %v1347
        %v1412 = vunpack.c.l.bf16 %v1348
        %v1413 = vunpack.c.l.bf16 %v1349
        %v1414 = vunpack.c.l.bf16 %v1350
        %v1415 = vunpack.c.l.bf16 %v1351
        %v1416 = vunpack.c.l.bf16 %v1352
        %v1417 = vunpack.c.l.bf16 %v1353
        %v1418 = vunpack.c.l.bf16 %v1354
        %v1419 = vunpack.c.l.bf16 %v1355
        %v1420 = vunpack.c.l.bf16 %v1356
        %v1421 = vunpack.c.l.bf16 %v1357
        %v1422 = vunpack.c.l.bf16 %v1358
        %v1423 = vunpack.c.l.bf16 %v1359
        %v1424 = vunpack.c.l.bf16 %v1360
        %v1425 = vunpack.c.l.bf16 %v1361
        %v1426 = vunpack.c.l.bf16 %v1362
        %v1427 = vunpack.c.l.bf16 %v1363
        %v1428 = vunpack.c.l.bf16 %v1364
        %v1429 = vunpack.c.l.bf16 %v1365
        %v1430 = vunpack.c.l.bf16 %v1366
        %v1431 = vunpack.c.l.bf16 %v1367
        %v1432 = vunpack.c.l.bf16 %v1368
        %v1433 = vunpack.c.l.bf16 %v1369
        %v1434 = vunpack.c.l.bf16 %v1370
        %v1435 = vunpack.c.l.bf16 %v1371
        %v1436 = vunpack.c.l.bf16 %v1372
        %v1437 = vunpack.c.l.bf16 %v1373
        %v1438 = vunpack.c.l.bf16 %v1374
        %v1439 = vunpack.c.l.bf16 %v1375
        %v1440 = vunpack.c.l.bf16 %v1376
        %v1441 = vunpack.c.l.bf16 %v1377
        %v1442 = vunpack.c.l.bf16 %v1378
        %v1443 = vunpack.c.l.bf16 %v1379
        %v1444 = vunpack.c.l.bf16 %v1380
        %v1445 = vunpack.c.l.bf16 %v1381
        %v1446 = vstv %s1317
        %v1447 = vmul.f32 %v1446, %v1382
        %v1448 = vmul.f32 %v1446, %v1383
        %v1449 = vmul.f32 %v1446, %v1384
        %v1450 = vmul.f32 %v1446, %v1385
        %v1451 = vmul.f32 %v1446, %v1386
        %v1452 = vmul.f32 %v1446, %v1387
        %v1453 = vmul.f32 %v1446, %v1388
        %v1454 = vmul.f32 %v1446, %v1389
        %v1455 = vmul.f32 %v1446, %v1390
        %v1456 = vmul.f32 %v1446, %v1391
        %v1457 = vmul.f32 %v1446, %v1392
        %v1458 = vmul.f32 %v1446, %v1393
        %v1459 = vmul.f32 %v1446, %v1394
        %v1460 = vmul.f32 %v1446, %v1395
        %v1461 = vmul.f32 %v1446, %v1396
        %v1462 = vmul.f32 %v1446, %v1397
        %v1463 = vmul.f32 %v1446, %v1398
        %v1464 = vmul.f32 %v1446, %v1399
        %v1465 = vmul.f32 %v1446, %v1400
        %v1466 = vmul.f32 %v1446, %v1401
        %v1467 = vmul.f32 %v1446, %v1402
        %v1468 = vmul.f32 %v1446, %v1403
        %v1469 = vmul.f32 %v1446, %v1404
        %v1470 = vmul.f32 %v1446, %v1405
        %v1471 = vmul.f32 %v1446, %v1406
        %v1472 = vmul.f32 %v1446, %v1407
        %v1473 = vmul.f32 %v1446, %v1408
        %v1474 = vmul.f32 %v1446, %v1409
        %v1475 = vmul.f32 %v1446, %v1410
        %v1476 = vmul.f32 %v1446, %v1411
        %v1477 = vmul.f32 %v1446, %v1412
        %v1478 = vmul.f32 %v1446, %v1413
        %v1479 = vmul.f32 %v1446, %v1414
        %v1480 = vmul.f32 %v1446, %v1415
        %v1481 = vmul.f32 %v1446, %v1416
        %v1482 = vmul.f32 %v1446, %v1417
        %v1483 = vmul.f32 %v1446, %v1418
        %v1484 = vmul.f32 %v1446, %v1419
        %v1485 = vmul.f32 %v1446, %v1420
        %v1486 = vmul.f32 %v1446, %v1421
        %v1487 = vmul.f32 %v1446, %v1422
        %v1488 = vmul.f32 %v1446, %v1423
        %v1489 = vmul.f32 %v1446, %v1424
        %v1490 = vmul.f32 %v1446, %v1425
        %v1491 = vmul.f32 %v1446, %v1426
        %v1492 = vmul.f32 %v1446, %v1427
        %v1493 = vmul.f32 %v1446, %v1428
        %v1494 = vmul.f32 %v1446, %v1429
        %v1495 = vmul.f32 %v1446, %v1430
        %v1496 = vmul.f32 %v1446, %v1431
        %v1497 = vmul.f32 %v1446, %v1432
        %v1498 = vmul.f32 %v1446, %v1433
        %v1499 = vmul.f32 %v1446, %v1434
        %v1500 = vmul.f32 %v1446, %v1435
        %v1501 = vmul.f32 %v1446, %v1436
        %v1502 = vmul.f32 %v1446, %v1437
        %v1503 = vmul.f32 %v1446, %v1438
        %v1504 = vmul.f32 %v1446, %v1439
        %v1505 = vmul.f32 %v1446, %v1440
        %v1506 = vmul.f32 %v1446, %v1441
        %v1507 = vmul.f32 %v1446, %v1442
        %v1508 = vmul.f32 %v1446, %v1443
        %v1509 = vmul.f32 %v1446, %v1444
        %v1510 = vmul.f32 %v1446, %v1445
        %v1511 = vadd.f32 %v1253, %v1447
        %v1512 = vadd.f32 %v1254, %v1448
        %v1513 = vadd.f32 %v1255, %v1449
        %v1514 = vadd.f32 %v1256, %v1450
        %v1515 = vadd.f32 %v1257, %v1451
        %v1516 = vadd.f32 %v1258, %v1452
        %v1517 = vadd.f32 %v1259, %v1453
        %v1518 = vadd.f32 %v1260, %v1454
        %v1519 = vadd.f32 %v1261, %v1455
        %v1520 = vadd.f32 %v1262, %v1456
        %v1521 = vadd.f32 %v1263, %v1457
        %v1522 = vadd.f32 %v1264, %v1458
        %v1523 = vadd.f32 %v1265, %v1459
        %v1524 = vadd.f32 %v1266, %v1460
        %v1525 = vadd.f32 %v1267, %v1461
        %v1526 = vadd.f32 %v1268, %v1462
        %v1527 = vadd.f32 %v1269, %v1463
        %v1528 = vadd.f32 %v1270, %v1464
        %v1529 = vadd.f32 %v1271, %v1465
        %v1530 = vadd.f32 %v1272, %v1466
        %v1531 = vadd.f32 %v1273, %v1467
        %v1532 = vadd.f32 %v1274, %v1468
        %v1533 = vadd.f32 %v1275, %v1469
        %v1534 = vadd.f32 %v1276, %v1470
        %v1535 = vadd.f32 %v1277, %v1471
        %v1536 = vadd.f32 %v1278, %v1472
        %v1537 = vadd.f32 %v1279, %v1473
        %v1538 = vadd.f32 %v1280, %v1474
        %v1539 = vadd.f32 %v1281, %v1475
        %v1540 = vadd.f32 %v1282, %v1476
        %v1541 = vadd.f32 %v1283, %v1477
        %v1542 = vadd.f32 %v1284, %v1478
        %v1543 = vadd.f32 %v1285, %v1479
        %v1544 = vadd.f32 %v1286, %v1480
        %v1545 = vadd.f32 %v1287, %v1481
        %v1546 = vadd.f32 %v1288, %v1482
        %v1547 = vadd.f32 %v1289, %v1483
        %v1548 = vadd.f32 %v1290, %v1484
        %v1549 = vadd.f32 %v1291, %v1485
        %v1550 = vadd.f32 %v1292, %v1486
        %v1551 = vadd.f32 %v1293, %v1487
        %v1552 = vadd.f32 %v1294, %v1488
        %v1553 = vadd.f32 %v1295, %v1489
        %v1554 = vadd.f32 %v1296, %v1490
        %v1555 = vadd.f32 %v1297, %v1491
        %v1556 = vadd.f32 %v1298, %v1492
        %v1557 = vadd.f32 %v1299, %v1493
        %v1558 = vadd.f32 %v1300, %v1494
        %v1559 = vadd.f32 %v1301, %v1495
        %v1560 = vadd.f32 %v1302, %v1496
        %v1561 = vadd.f32 %v1303, %v1497
        %v1562 = vadd.f32 %v1304, %v1498
        %v1563 = vadd.f32 %v1305, %v1499
        %v1564 = vadd.f32 %v1306, %v1500
        %v1565 = vadd.f32 %v1307, %v1501
        %v1566 = vadd.f32 %v1308, %v1502
        %v1567 = vadd.f32 %v1309, %v1503
        %v1568 = vadd.f32 %v1310, %v1504
        %v1569 = vadd.f32 %v1311, %v1505
        %v1570 = vadd.f32 %v1312, %v1506
        %v1571 = vadd.f32 %v1313, %v1507
        %v1572 = vadd.f32 %v1314, %v1508
        %v1573 = vadd.f32 %v1315, %v1509
        %v1574 = vadd.f32 %v1316, %v1510
        %v1575 = vpack.c.bf16 %v1512, %v1511
        %v1576 = vpack.c.bf16 %v1514, %v1513
        %v1577 = vpack.c.bf16 %v1516, %v1515
        %v1578 = vpack.c.bf16 %v1518, %v1517
        %v1579 = vpack.c.bf16 %v1520, %v1519
        %v1580 = vpack.c.bf16 %v1522, %v1521
        %v1581 = vpack.c.bf16 %v1524, %v1523
        %v1582 = vpack.c.bf16 %v1526, %v1525
        %v1583 = vpack.c.bf16 %v1528, %v1527
        %v1584 = vpack.c.bf16 %v1530, %v1529
        %v1585 = vpack.c.bf16 %v1532, %v1531
        %v1586 = vpack.c.bf16 %v1534, %v1533
        %v1587 = vpack.c.bf16 %v1536, %v1535
        %v1588 = vpack.c.bf16 %v1538, %v1537
        %v1589 = vpack.c.bf16 %v1540, %v1539
        %v1590 = vpack.c.bf16 %v1542, %v1541
        %v1591 = vpack.c.bf16 %v1544, %v1543
        %v1592 = vpack.c.bf16 %v1546, %v1545
        %v1593 = vpack.c.bf16 %v1548, %v1547
        %v1594 = vpack.c.bf16 %v1550, %v1549
        %v1595 = vpack.c.bf16 %v1552, %v1551
        %v1596 = vpack.c.bf16 %v1554, %v1553
        %v1597 = vpack.c.bf16 %v1556, %v1555
        %v1598 = vpack.c.bf16 %v1558, %v1557
        %v1599 = vpack.c.bf16 %v1560, %v1559
        %v1600 = vpack.c.bf16 %v1562, %v1561
        %v1601 = vpack.c.bf16 %v1564, %v1563
        %v1602 = vpack.c.bf16 %v1566, %v1565
        %v1603 = vpack.c.bf16 %v1568, %v1567
        %v1604 = vpack.c.bf16 %v1570, %v1569
        %v1605 = vpack.c.bf16 %v1572, %v1571
        %v1606 = vpack.c.bf16 %v1574, %v1573
        %v1607 = vld [vmem:[%s5] sm:$0xf]
        %v1608 = vld [vmem:[%s5 + $0x4] sm:$0xf]
        %v1609 = vld [vmem:[%s5 + $0x8] sm:$0xf]
        %v1610 = vld [vmem:[%s5 + $0xc] sm:$0xf]
        %v1611 = vld [vmem:[%s5 + $0x10] sm:$0xf]
        %v1612 = vld [vmem:[%s5 + $0x14] sm:$0xf]
        %v1613 = vld [vmem:[%s5 + $0x18] sm:$0xf]
        %v1614 = vld [vmem:[%s5 + $0x1c] sm:$0xf]
        %v1615 = vld [vmem:[%s5 + $0x20] sm:$0xf]
        %v1616 = vld [vmem:[%s5 + $0x24] sm:$0xf]
        %v1617 = vld [vmem:[%s5 + $0x28] sm:$0xf]
        %v1618 = vld [vmem:[%s5 + $0x2c] sm:$0xf]
        %v1619 = vld [vmem:[%s6] sm:$0x1]
        %v1621 = vlaneseq
        %v1622 = vshrl.u32 %v1621, 7
        %v1623 = vsub.s32 0, %v1622
        %v1624 = vrot.slane %v1619, %v1623
        %v1638 = vunpack.c.l.b16 %v1607
        %v1639 = vunpack.c.l.b16 %v1608
        %v1640 = vunpack.c.l.b16 %v1609
        %v1641 = vunpack.c.l.b16 %v1610
        %v1642 = vunpack.c.l.b16 %v1611
        %v1643 = vunpack.c.l.b16 %v1612
        %v1644 = vunpack.c.l.b16 %v1613
        %v1645 = vunpack.c.l.b16 %v1614
        %v1646 = vunpack.c.l.b16 %v1615
        %v1647 = vunpack.c.l.b16 %v1616
        %v1648 = vunpack.c.l.b16 %v1617
        %v1649 = vunpack.c.l.b16 %v1618
        %v1650 = vpack.c.b16 %v1639, %v1638
        %v1651 = vpack.c.b16 %v1641, %v1640
        %v1652 = vpack.c.b16 %v1643, %v1642
        %v1653 = vpack.c.b16 %v1645, %v1644
        %v1654 = vpack.c.b16 %v1647, %v1646
        %v1655 = vpack.c.b16 %v1649, %v1648
        %vm1662 = vcmask 785408
        %v1664 = vsel %vm1662, %v1575, 0
        %v1667 = vsel %vm1662, %v1576, 0
        %v1670 = vsel %vm1662, %v1577, 0
        %v1673 = vsel %vm1662, %v1578, 0
        %v1676 = vsel %vm1662, %v1579, 0
        %v1679 = vsel %vm1662, %v1580, 0
        %v1682 = vsel %vm1662, %v1581, 0
        %v1685 = vsel %vm1662, %v1582, 0
        %v1688 = vsel %vm1662, %v1583, 0
        %v1691 = vsel %vm1662, %v1584, 0
        %v1694 = vsel %vm1662, %v1585, 0
        %v1697 = vsel %vm1662, %v1586, 0
        %v1700 = vsel %vm1662, %v1587, 0
        %v1703 = vsel %vm1662, %v1588, 0
        %v1706 = vsel %vm1662, %v1589, 0
        %v1709 = vsel %vm1662, %v1590, 0
        %v1712 = vsel %vm1662, %v1591, 0
        %v1715 = vsel %vm1662, %v1592, 0
        %v1718 = vsel %vm1662, %v1593, 0
        %v1721 = vsel %vm1662, %v1594, 0
        %v1724 = vsel %vm1662, %v1595, 0
        %v1727 = vsel %vm1662, %v1596, 0
        %v1730 = vsel %vm1662, %v1597, 0
        %v1733 = vsel %vm1662, %v1598, 0
        %v1736 = vsel %vm1662, %v1599, 0
        %v1739 = vsel %vm1662, %v1600, 0
        %v1742 = vsel %vm1662, %v1601, 0
        %v1745 = vsel %vm1662, %v1602, 0
        %v1748 = vsel %vm1662, %v1603, 0
        %v1751 = vsel %vm1662, %v1604, 0
        %v1754 = vsel %vm1662, %v1605, 0
        %v1757 = vsel %vm1662, %v1606, 0
        %1759 = vmatprep.subr.bf16.mxu0 0
        %1760 = vmatpush1.bf16.msra.mxu0 0
        %1761 = vmatprep.subr.bf16.mxu0 0
        %1762 = vmatpush1.bf16.msra.mxu0 0
        %1763 = vmatprep.subr.bf16.mxu0 0
        %1764 = vmatpush1.bf16.msra.mxu0 %v1655
        %1765 = vmatprep.subr.bf16.mxu0 0
        %1766 = vmatpush1.bf16.msra.mxu0 %v1654
        %1767 = vmatprep.subr.bf16.mxu0 0
        %1768 = vmatpush1.bf16.msra.mxu0 %v1653
        %1769 = vmatprep.subr.bf16.mxu0 0
        %1770 = vmatpush1.bf16.msra.mxu0 %v1652
        %1771 = vmatprep.subr.bf16.mxu0 0
        %1772 = vmatpush1.bf16.msra.mxu0 %v1651
        %1773 = vmatprep.subr.bf16.mxu0 0
        %1774 = vmatpush1.bf16.msra.mxu0 %v1650
        %1775 = vmatprep.subr.bf16.mxu0 0
        %1776 = vmatpush2.bf16.msra.mxu0 0
        %1777 = vmatprep.subr.bf16.mxu0 0
        %1778 = vmatpush2.bf16.msra.mxu0 0
        %1779 = vmatprep.subr.bf16.mxu0 0
        %1780 = vmatpush2.bf16.msra.mxu0 0
        %1781 = vmatprep.subr.bf16.mxu0 0
        %1782 = vmatpush2.bf16.msra.mxu0 0
        %1783 = vmatprep.subr.bf16.mxu0 0
        %1784 = vmatpush2.bf16.msra.mxu0 0
        %1785 = vmatprep.subr.bf16.mxu0 0
        %1786 = vmatpush2.bf16.msra.mxu0 0
        %1787 = vmatprep.subr.bf16.mxu0 0
        %1788 = vmatpush2.bf16.msra.mxu0 0
        %1789 = vmatprep.subr.bf16.mxu0 0
        %1790 = vmatpush2.bf16.msra.mxu0 0
        %1791 = vmatprep.mubr.bf16.mxu0 0
        %1792 = vmatmul.mubr.bf16.gmra.mxu0 %v1664
        %v1793 = vpop.f32.mrf.mxu0
        %v1794 = vadd.f32 %v1624, %v1793
        %v1795 = vpop.f32.mrf.mxu0
        %v1796 = vpop.f32.mrf.mxu0
        %v1797 = vadd.f32 %v1624, %v1796
        %v1798 = vpop.f32.mrf.mxu0
        %1799 = vmatprep.mubr.bf16.mxu0 0
        %1800 = vmatmul.mubr.bf16.gmra.mxu0 %v1667
        %v1801 = vpop.f32.mrf.mxu0
        %v1802 = vadd.f32 %v1624, %v1801
        %v1803 = vpop.f32.mrf.mxu0
        %v1804 = vpop.f32.mrf.mxu0
        %v1805 = vadd.f32 %v1624, %v1804
        %v1806 = vpop.f32.mrf.mxu0
        %1807 = vmatprep.mubr.bf16.mxu0 0
        %1808 = vmatmul.mubr.bf16.gmra.mxu0 %v1670
        %v1809 = vpop.f32.mrf.mxu0
        %v1810 = vadd.f32 %v1624, %v1809
        %v1811 = vpop.f32.mrf.mxu0
        %v1812 = vpop.f32.mrf.mxu0
        %v1813 = vadd.f32 %v1624, %v1812
        %v1814 = vpop.f32.mrf.mxu0
        %1815 = vmatprep.mubr.bf16.mxu0 0
        %1816 = vmatmul.mubr.bf16.gmra.mxu0 %v1673
        %v1817 = vpop.f32.mrf.mxu0
        %v1818 = vadd.f32 %v1624, %v1817
        %v1819 = vpop.f32.mrf.mxu0
        %v1820 = vpop.f32.mrf.mxu0
        %v1821 = vadd.f32 %v1624, %v1820
        %v1822 = vpop.f32.mrf.mxu0
        %1823 = vmatprep.mubr.bf16.mxu0 0
        %1824 = vmatmul.mubr.bf16.gmra.mxu0 %v1676
        %v1825 = vpop.f32.mrf.mxu0
        %v1826 = vadd.f32 %v1624, %v1825
        %v1827 = vpop.f32.mrf.mxu0
        %v1828 = vpop.f32.mrf.mxu0
        %v1829 = vadd.f32 %v1624, %v1828
        %v1830 = vpop.f32.mrf.mxu0
        %1831 = vmatprep.mubr.bf16.mxu0 0
        %1832 = vmatmul.mubr.bf16.gmra.mxu0 %v1679
        %v1833 = vpop.f32.mrf.mxu0
        %v1834 = vadd.f32 %v1624, %v1833
        %v1835 = vpop.f32.mrf.mxu0
        %v1836 = vpop.f32.mrf.mxu0
        %v1837 = vadd.f32 %v1624, %v1836
        %v1838 = vpop.f32.mrf.mxu0
        %1839 = vmatprep.mubr.bf16.mxu0 0
        %1840 = vmatmul.mubr.bf16.gmra.mxu0 %v1682
        %v1841 = vpop.f32.mrf.mxu0
        %v1842 = vadd.f32 %v1624, %v1841
        %v1843 = vpop.f32.mrf.mxu0
        %v1844 = vpop.f32.mrf.mxu0
        %v1845 = vadd.f32 %v1624, %v1844
        %v1846 = vpop.f32.mrf.mxu0
        %1847 = vmatprep.mubr.bf16.mxu0 0
        %1848 = vmatmul.mubr.bf16.gmra.mxu0 %v1685
        %v1849 = vpop.f32.mrf.mxu0
        %v1850 = vadd.f32 %v1624, %v1849
        %v1851 = vpop.f32.mrf.mxu0
        %v1852 = vpop.f32.mrf.mxu0
        %v1853 = vadd.f32 %v1624, %v1852
        %v1854 = vpop.f32.mrf.mxu0
        %1855 = vmatprep.mubr.bf16.mxu0 0
        %1856 = vmatmul.mubr.bf16.gmra.mxu0 %v1688
        %v1857 = vpop.f32.mrf.mxu0
        %v1858 = vadd.f32 %v1624, %v1857
        %v1859 = vpop.f32.mrf.mxu0
        %v1860 = vpop.f32.mrf.mxu0
        %v1861 = vadd.f32 %v1624, %v1860
        %v1862 = vpop.f32.mrf.mxu0
        %1863 = vmatprep.mubr.bf16.mxu0 0
        %1864 = vmatmul.mubr.bf16.gmra.mxu0 %v1691
        %v1865 = vpop.f32.mrf.mxu0
        %v1866 = vadd.f32 %v1624, %v1865
        %v1867 = vpop.f32.mrf.mxu0
        %v1868 = vpop.f32.mrf.mxu0
        %v1869 = vadd.f32 %v1624, %v1868
        %v1870 = vpop.f32.mrf.mxu0
        %1871 = vmatprep.mubr.bf16.mxu0 0
        %1872 = vmatmul.mubr.bf16.gmra.mxu0 %v1694
        %v1873 = vpop.f32.mrf.mxu0
        %v1874 = vadd.f32 %v1624, %v1873
        %v1875 = vpop.f32.mrf.mxu0
        %v1876 = vpop.f32.mrf.mxu0
        %v1877 = vadd.f32 %v1624, %v1876
        %v1878 = vpop.f32.mrf.mxu0
        %1879 = vmatprep.mubr.bf16.mxu0 0
        %1880 = vmatmul.mubr.bf16.gmra.mxu0 %v1697
        %v1881 = vpop.f32.mrf.mxu0
        %v1882 = vadd.f32 %v1624, %v1881
        %v1883 = vpop.f32.mrf.mxu0
        %v1884 = vpop.f32.mrf.mxu0
        %v1885 = vadd.f32 %v1624, %v1884
        %v1886 = vpop.f32.mrf.mxu0
        %1887 = vmatprep.mubr.bf16.mxu0 0
        %1888 = vmatmul.mubr.bf16.gmra.mxu0 %v1700
        %v1889 = vpop.f32.mrf.mxu0
        %v1890 = vadd.f32 %v1624, %v1889
        %v1891 = vpop.f32.mrf.mxu0
        %v1892 = vpop.f32.mrf.mxu0
        %v1893 = vadd.f32 %v1624, %v1892
        %v1894 = vpop.f32.mrf.mxu0
        %1895 = vmatprep.mubr.bf16.mxu0 0
        %1896 = vmatmul.mubr.bf16.gmra.mxu0 %v1703
        %v1897 = vpop.f32.mrf.mxu0
        %v1898 = vadd.f32 %v1624, %v1897
        %v1899 = vpop.f32.mrf.mxu0
        %v1900 = vpop.f32.mrf.mxu0
        %v1901 = vadd.f32 %v1624, %v1900
        %v1902 = vpop.f32.mrf.mxu0
        %1903 = vmatprep.mubr.bf16.mxu0 0
        %1904 = vmatmul.mubr.bf16.gmra.mxu0 %v1706
        %v1905 = vpop.f32.mrf.mxu0
        %v1906 = vadd.f32 %v1624, %v1905
        %v1907 = vpop.f32.mrf.mxu0
        %v1908 = vpop.f32.mrf.mxu0
        %v1909 = vadd.f32 %v1624, %v1908
        %v1910 = vpop.f32.mrf.mxu0
        %1911 = vmatprep.mubr.bf16.mxu0 0
        %1912 = vmatmul.mubr.bf16.gmra.mxu0 %v1709
        %v1913 = vpop.f32.mrf.mxu0
        %v1914 = vadd.f32 %v1624, %v1913
        %v1915 = vpop.f32.mrf.mxu0
        %v1916 = vpop.f32.mrf.mxu0
        %v1917 = vadd.f32 %v1624, %v1916
        %v1918 = vpop.f32.mrf.mxu0
        %1919 = vmatprep.mubr.bf16.mxu0 0
        %1920 = vmatmul.mubr.bf16.gmra.mxu0 %v1712
        %v1921 = vpop.f32.mrf.mxu0
        %v1922 = vadd.f32 %v1624, %v1921
        %v1923 = vpop.f32.mrf.mxu0
        %v1924 = vpop.f32.mrf.mxu0
        %v1925 = vadd.f32 %v1624, %v1924
        %v1926 = vpop.f32.mrf.mxu0
        %1927 = vmatprep.mubr.bf16.mxu0 0
        %1928 = vmatmul.mubr.bf16.gmra.mxu0 %v1715
        %v1929 = vpop.f32.mrf.mxu0
        %v1930 = vadd.f32 %v1624, %v1929
        %v1931 = vpop.f32.mrf.mxu0
        %v1932 = vpop.f32.mrf.mxu0
        %v1933 = vadd.f32 %v1624, %v1932
        %v1934 = vpop.f32.mrf.mxu0
        %1935 = vmatprep.mubr.bf16.mxu0 0
        %1936 = vmatmul.mubr.bf16.gmra.mxu0 %v1718
        %v1937 = vpop.f32.mrf.mxu0
        %v1938 = vadd.f32 %v1624, %v1937
        %v1939 = vpop.f32.mrf.mxu0
        %v1940 = vpop.f32.mrf.mxu0
        %v1941 = vadd.f32 %v1624, %v1940
        %v1942 = vpop.f32.mrf.mxu0
        %1943 = vmatprep.mubr.bf16.mxu0 0
        %1944 = vmatmul.mubr.bf16.gmra.mxu0 %v1721
        %v1945 = vpop.f32.mrf.mxu0
        %v1946 = vadd.f32 %v1624, %v1945
        %v1947 = vpop.f32.mrf.mxu0
        %v1948 = vpop.f32.mrf.mxu0
        %v1949 = vadd.f32 %v1624, %v1948
        %v1950 = vpop.f32.mrf.mxu0
        %1951 = vmatprep.mubr.bf16.mxu0 0
        %1952 = vmatmul.mubr.bf16.gmra.mxu0 %v1724
        %v1953 = vpop.f32.mrf.mxu0
        %v1954 = vadd.f32 %v1624, %v1953
        %v1955 = vpop.f32.mrf.mxu0
        %v1956 = vpop.f32.mrf.mxu0
        %v1957 = vadd.f32 %v1624, %v1956
        %v1958 = vpop.f32.mrf.mxu0
        %1959 = vmatprep.mubr.bf16.mxu0 0
        %1960 = vmatmul.mubr.bf16.gmra.mxu0 %v1727
        %v1961 = vpop.f32.mrf.mxu0
        %v1962 = vadd.f32 %v1624, %v1961
        %v1963 = vpop.f32.mrf.mxu0
        %v1964 = vpop.f32.mrf.mxu0
        %v1965 = vadd.f32 %v1624, %v1964
        %v1966 = vpop.f32.mrf.mxu0
        %1967 = vmatprep.mubr.bf16.mxu0 0
        %1968 = vmatmul.mubr.bf16.gmra.mxu0 %v1730
        %v1969 = vpop.f32.mrf.mxu0
        %v1970 = vadd.f32 %v1624, %v1969
        %v1971 = vpop.f32.mrf.mxu0
        %v1972 = vpop.f32.mrf.mxu0
        %v1973 = vadd.f32 %v1624, %v1972
        %v1974 = vpop.f32.mrf.mxu0
        %1975 = vmatprep.mubr.bf16.mxu0 0
        %1976 = vmatmul.mubr.bf16.gmra.mxu0 %v1733
        %v1977 = vpop.f32.mrf.mxu0
        %v1978 = vadd.f32 %v1624, %v1977
        %v1979 = vpop.f32.mrf.mxu0
        %v1980 = vpop.f32.mrf.mxu0
        %v1981 = vadd.f32 %v1624, %v1980
        %v1982 = vpop.f32.mrf.mxu0
        %1983 = vmatprep.mubr.bf16.mxu0 0
        %1984 = vmatmul.mubr.bf16.gmra.mxu0 %v1736
        %v1985 = vpop.f32.mrf.mxu0
        %v1986 = vadd.f32 %v1624, %v1985
        %v1987 = vpop.f32.mrf.mxu0
        %v1988 = vpop.f32.mrf.mxu0
        %v1989 = vadd.f32 %v1624, %v1988
        %v1990 = vpop.f32.mrf.mxu0
        %1991 = vmatprep.mubr.bf16.mxu0 0
        %1992 = vmatmul.mubr.bf16.gmra.mxu0 %v1739
        %v1993 = vpop.f32.mrf.mxu0
        %v1994 = vadd.f32 %v1624, %v1993
        %v1995 = vpop.f32.mrf.mxu0
        %v1996 = vpop.f32.mrf.mxu0
        %v1997 = vadd.f32 %v1624, %v1996
        %v1998 = vpop.f32.mrf.mxu0
        %1999 = vmatprep.mubr.bf16.mxu0 0
        %2000 = vmatmul.mubr.bf16.gmra.mxu0 %v1742
        %v2001 = vpop.f32.mrf.mxu0
        %v2002 = vadd.f32 %v1624, %v2001
        %v2003 = vpop.f32.mrf.mxu0
        %v2004 = vpop.f32.mrf.mxu0
        %v2005 = vadd.f32 %v1624, %v2004
        %v2006 = vpop.f32.mrf.mxu0
        %2007 = vmatprep.mubr.bf16.mxu0 0
        %2008 = vmatmul.mubr.bf16.gmra.mxu0 %v1745
        %v2009 = vpop.f32.mrf.mxu0
        %v2010 = vadd.f32 %v1624, %v2009
        %v2011 = vpop.f32.mrf.mxu0
        %v2012 = vpop.f32.mrf.mxu0
        %v2013 = vadd.f32 %v1624, %v2012
        %v2014 = vpop.f32.mrf.mxu0
        %2015 = vmatprep.mubr.bf16.mxu0 0
        %2016 = vmatmul.mubr.bf16.gmra.mxu0 %v1748
        %v2017 = vpop.f32.mrf.mxu0
        %v2018 = vadd.f32 %v1624, %v2017
        %v2019 = vpop.f32.mrf.mxu0
        %v2020 = vpop.f32.mrf.mxu0
        %v2021 = vadd.f32 %v1624, %v2020
        %v2022 = vpop.f32.mrf.mxu0
        %2023 = vmatprep.mubr.bf16.mxu0 0
        %2024 = vmatmul.mubr.bf16.gmra.mxu0 %v1751
        %v2025 = vpop.f32.mrf.mxu0
        %v2026 = vadd.f32 %v1624, %v2025
        %v2027 = vpop.f32.mrf.mxu0
        %v2028 = vpop.f32.mrf.mxu0
        %v2029 = vadd.f32 %v1624, %v2028
        %v2030 = vpop.f32.mrf.mxu0
        %2031 = vmatprep.mubr.bf16.mxu0 0
        %2032 = vmatmul.mubr.bf16.gmra.mxu0 %v1754
        %v2033 = vpop.f32.mrf.mxu0
        %v2034 = vadd.f32 %v1624, %v2033
        %v2035 = vpop.f32.mrf.mxu0
        %v2036 = vpop.f32.mrf.mxu0
        %v2037 = vadd.f32 %v1624, %v2036
        %v2038 = vpop.f32.mrf.mxu0
        %2039 = vmatprep.mubr.bf16.mxu0 0
        %2040 = vmatmul.mubr.bf16.gmra.mxu0 %v1757
        %v2041 = vpop.f32.mrf.mxu0
        %v2042 = vadd.f32 %v1624, %v2041
        %v2043 = vpop.f32.mrf.mxu0
        %v2044 = vpop.f32.mrf.mxu0
        %v2045 = vadd.f32 %v1624, %v2044
        %v2046 = vpop.f32.mrf.mxu0
        %2047 = vdwg.mxu0
        %v2048 = vmax.f32 %v1794, 0.0
        %v2049 = vmax.f32 %v1797, 0.0
        %v2050 = vmax.f32 %v1802, 0.0
        %v2051 = vmax.f32 %v1805, 0.0
        %v2052 = vmax.f32 %v1810, 0.0
        %v2053 = vmax.f32 %v1813, 0.0
        %v2054 = vmax.f32 %v1818, 0.0
        %v2055 = vmax.f32 %v1821, 0.0
        %v2056 = vmax.f32 %v1826, 0.0
        %v2057 = vmax.f32 %v1829, 0.0
        %v2058 = vmax.f32 %v1834, 0.0
        %v2059 = vmax.f32 %v1837, 0.0
        %v2060 = vmax.f32 %v1842, 0.0
        %v2061 = vmax.f32 %v1845, 0.0
        %v2062 = vmax.f32 %v1850, 0.0
        %v2063 = vmax.f32 %v1853, 0.0
        %v2064 = vmax.f32 %v1858, 0.0
        %v2065 = vmax.f32 %v1861, 0.0
        %v2066 = vmax.f32 %v1866, 0.0
        %v2067 = vmax.f32 %v1869, 0.0
        %v2068 = vmax.f32 %v1874, 0.0
        %v2069 = vmax.f32 %v1877, 0.0
        %v2070 = vmax.f32 %v1882, 0.0
        %v2071 = vmax.f32 %v1885, 0.0
        %v2072 = vmax.f32 %v1890, 0.0
        %v2073 = vmax.f32 %v1893, 0.0
        %v2074 = vmax.f32 %v1898, 0.0
        %v2075 = vmax.f32 %v1901, 0.0
        %v2076 = vmax.f32 %v1906, 0.0
        %v2077 = vmax.f32 %v1909, 0.0
        %v2078 = vmax.f32 %v1914, 0.0
        %v2079 = vmax.f32 %v1917, 0.0
        %v2080 = vmax.f32 %v1922, 0.0
        %v2081 = vmax.f32 %v1925, 0.0
        %v2082 = vmax.f32 %v1930, 0.0
        %v2083 = vmax.f32 %v1933, 0.0
        %v2084 = vmax.f32 %v1938, 0.0
        %v2085 = vmax.f32 %v1941, 0.0
        %v2086 = vmax.f32 %v1946, 0.0
        %v2087 = vmax.f32 %v1949, 0.0
        %v2088 = vmax.f32 %v1954, 0.0
        %v2089 = vmax.f32 %v1957, 0.0
        %v2090 = vmax.f32 %v1962, 0.0
        %v2091 = vmax.f32 %v1965, 0.0
        %v2092 = vmax.f32 %v1970, 0.0
        %v2093 = vmax.f32 %v1973, 0.0
        %v2094 = vmax.f32 %v1978, 0.0
        %v2095 = vmax.f32 %v1981, 0.0
        %v2096 = vmax.f32 %v1986, 0.0
        %v2097 = vmax.f32 %v1989, 0.0
        %v2098 = vmax.f32 %v1994, 0.0
        %v2099 = vmax.f32 %v1997, 0.0
        %v2100 = vmax.f32 %v2002, 0.0
        %v2101 = vmax.f32 %v2005, 0.0
        %v2102 = vmax.f32 %v2010, 0.0
        %v2103 = vmax.f32 %v2013, 0.0
        %v2104 = vmax.f32 %v2018, 0.0
        %v2105 = vmax.f32 %v2021, 0.0
        %v2106 = vmax.f32 %v2026, 0.0
        %v2107 = vmax.f32 %v2029, 0.0
        %v2108 = vmax.f32 %v2034, 0.0
        %v2109 = vmax.f32 %v2037, 0.0
        %v2110 = vmax.f32 %v2042, 0.0
        %v2111 = vmax.f32 %v2045, 0.0
        %v2112 = vpack.c.bf16 %v2049, %v2048
        %v2113 = vpack.c.bf16 %v2051, %v2050
        %v2114 = vpack.c.bf16 %v2053, %v2052
        %v2115 = vpack.c.bf16 %v2055, %v2054
        %v2116 = vpack.c.bf16 %v2057, %v2056
        %v2117 = vpack.c.bf16 %v2059, %v2058
        %v2118 = vpack.c.bf16 %v2061, %v2060
        %v2119 = vpack.c.bf16 %v2063, %v2062
        %v2120 = vpack.c.bf16 %v2065, %v2064
        %v2121 = vpack.c.bf16 %v2067, %v2066
        %v2122 = vpack.c.bf16 %v2069, %v2068
        %v2123 = vpack.c.bf16 %v2071, %v2070
        %v2124 = vpack.c.bf16 %v2073, %v2072
        %v2125 = vpack.c.bf16 %v2075, %v2074
        %v2126 = vpack.c.bf16 %v2077, %v2076
        %v2127 = vpack.c.bf16 %v2079, %v2078
        %v2128 = vpack.c.bf16 %v2081, %v2080
        %v2129 = vpack.c.bf16 %v2083, %v2082
        %v2130 = vpack.c.bf16 %v2085, %v2084
        %v2131 = vpack.c.bf16 %v2087, %v2086
        %v2132 = vpack.c.bf16 %v2089, %v2088
        %v2133 = vpack.c.bf16 %v2091, %v2090
        %v2134 = vpack.c.bf16 %v2093, %v2092
        %v2135 = vpack.c.bf16 %v2095, %v2094
        %v2136 = vpack.c.bf16 %v2097, %v2096
        %v2137 = vpack.c.bf16 %v2099, %v2098
        %v2138 = vpack.c.bf16 %v2101, %v2100
        %v2139 = vpack.c.bf16 %v2103, %v2102
        %v2140 = vpack.c.bf16 %v2105, %v2104
        %v2141 = vpack.c.bf16 %v2107, %v2106
        %v2142 = vpack.c.bf16 %v2109, %v2108
        %v2143 = vpack.c.bf16 %v2111, %v2110
        %v2144 = vld [vmem:[%s7] sm:$0xf]
        %v2145 = vld [vmem:[%s7 + $0x4] sm:$0xf]
        %v2146 = vld [vmem:[%s7 + $0x8] sm:$0xf]
        %v2147 = vld [vmem:[%s7 + $0xc] sm:$0xf]
        %v2148 = vld [vmem:[%s7 + $0x10] sm:$0xf]
        %v2149 = vld [vmem:[%s7 + $0x14] sm:$0xf]
        %v2150 = vld [vmem:[%s7 + $0x18] sm:$0xf]
        %v2151 = vld [vmem:[%s7 + $0x1c] sm:$0xf]
        %v2152 = vld [vmem:[%s7 + $0x20] sm:$0xf]
        %v2153 = vld [vmem:[%s7 + $0x24] sm:$0xf]
        %v2154 = vld [vmem:[%s7 + $0x28] sm:$0xf]
        %v2155 = vld [vmem:[%s7 + $0x2c] sm:$0xf]
        %v2156 = vld [vmem:[%s7 + $0x30] sm:$0xf]
        %v2157 = vld [vmem:[%s7 + $0x34] sm:$0xf]
        %v2158 = vld [vmem:[%s7 + $0x38] sm:$0xf]
        %v2159 = vld [vmem:[%s7 + $0x3c] sm:$0xf]
        %v2160 = vld [vmem:[%s8] sm:$0x1]
        %v2162 = vlaneseq
        %v2163 = vshrl.u32 %v2162, 7
        %v2164 = vsub.s32 0, %v2163
        %v2165 = vrot.slane %v2160, %v2164
        %v2183 = vunpack.c.l.b16 %v2144
        %v2184 = vunpack.c.l.b16 %v2145
        %v2185 = vunpack.c.l.b16 %v2146
        %v2186 = vunpack.c.l.b16 %v2147
        %v2187 = vunpack.c.l.b16 %v2148
        %v2188 = vunpack.c.l.b16 %v2149
        %v2189 = vunpack.c.l.b16 %v2150
        %v2190 = vunpack.c.l.b16 %v2151
        %v2191 = vunpack.c.l.b16 %v2152
        %v2192 = vunpack.c.l.b16 %v2153
        %v2193 = vunpack.c.l.b16 %v2154
        %v2194 = vunpack.c.l.b16 %v2155
        %v2195 = vunpack.c.l.b16 %v2156
        %v2196 = vunpack.c.l.b16 %v2157
        %v2197 = vunpack.c.l.b16 %v2158
        %v2198 = vunpack.c.l.b16 %v2159
        %v2199 = vpack.c.b16 %v2184, %v2183
        %v2200 = vpack.c.b16 %v2186, %v2185
        %v2201 = vpack.c.b16 %v2188, %v2187
        %v2202 = vpack.c.b16 %v2190, %v2189
        %v2203 = vpack.c.b16 %v2192, %v2191
        %v2204 = vpack.c.b16 %v2194, %v2193
        %v2205 = vpack.c.b16 %v2196, %v2195
        %v2206 = vpack.c.b16 %v2198, %v2197
        %2215 = vmatprep.subr.bf16.mxu0 0
        %2216 = vmatpush1.bf16.msra.mxu0 %v2206
        %2217 = vmatprep.subr.bf16.mxu0 0
        %2218 = vmatpush1.bf16.msra.mxu0 %v2205
        %2219 = vmatprep.subr.bf16.mxu0 0
        %2220 = vmatpush1.bf16.msra.mxu0 %v2204
        %2221 = vmatprep.subr.bf16.mxu0 0
        %2222 = vmatpush1.bf16.msra.mxu0 %v2203
        %2223 = vmatprep.subr.bf16.mxu0 0
        %2224 = vmatpush1.bf16.msra.mxu0 %v2202
        %2225 = vmatprep.subr.bf16.mxu0 0
        %2226 = vmatpush1.bf16.msra.mxu0 %v2201
        %2227 = vmatprep.subr.bf16.mxu0 0
        %2228 = vmatpush1.bf16.msra.mxu0 %v2200
        %2229 = vmatprep.subr.bf16.mxu0 0
        %2230 = vmatpush1.bf16.msra.mxu0 %v2199
        %2231 = vmatprep.subr.bf16.mxu0 0
        %2232 = vmatpush2.bf16.msra.mxu0 0
        %2233 = vmatprep.subr.bf16.mxu0 0
        %2234 = vmatpush2.bf16.msra.mxu0 0
        %2235 = vmatprep.subr.bf16.mxu0 0
        %2236 = vmatpush2.bf16.msra.mxu0 0
        %2237 = vmatprep.subr.bf16.mxu0 0
        %2238 = vmatpush2.bf16.msra.mxu0 0
        %2239 = vmatprep.subr.bf16.mxu0 0
        %2240 = vmatpush2.bf16.msra.mxu0 0
        %2241 = vmatprep.subr.bf16.mxu0 0
        %2242 = vmatpush2.bf16.msra.mxu0 0
        %2243 = vmatprep.subr.bf16.mxu0 0
        %2244 = vmatpush2.bf16.msra.mxu0 0
        %2245 = vmatprep.subr.bf16.mxu0 0
        %2246 = vmatpush2.bf16.msra.mxu0 0
        %2247 = vmatprep.mubr.bf16.mxu0 0
        %2248 = vmatmul.mubr.bf16.gmra.mxu0 %v2112
        %v2249 = vpop.f32.mrf.mxu0
        %v2250 = vadd.f32 %v2165, %v2249
        %v2251 = vpop.f32.mrf.mxu0
        %v2252 = vpop.f32.mrf.mxu0
        %v2253 = vadd.f32 %v2165, %v2252
        %v2254 = vpop.f32.mrf.mxu0
        %2255 = vmatprep.mubr.bf16.mxu0 0
        %2256 = vmatmul.mubr.bf16.gmra.mxu0 %v2113
        %v2257 = vpop.f32.mrf.mxu0
        %v2258 = vadd.f32 %v2165, %v2257
        %v2259 = vpop.f32.mrf.mxu0
        %v2260 = vpop.f32.mrf.mxu0
        %v2261 = vadd.f32 %v2165, %v2260
        %v2262 = vpop.f32.mrf.mxu0
        %2263 = vmatprep.mubr.bf16.mxu0 0
        %2264 = vmatmul.mubr.bf16.gmra.mxu0 %v2114
        %v2265 = vpop.f32.mrf.mxu0
        %v2266 = vadd.f32 %v2165, %v2265
        %v2267 = vpop.f32.mrf.mxu0
        %v2268 = vpop.f32.mrf.mxu0
        %v2269 = vadd.f32 %v2165, %v2268
        %v2270 = vpop.f32.mrf.mxu0
        %2271 = vmatprep.mubr.bf16.mxu0 0
        %2272 = vmatmul.mubr.bf16.gmra.mxu0 %v2115
        %v2273 = vpop.f32.mrf.mxu0
        %v2274 = vadd.f32 %v2165, %v2273
        %v2275 = vpop.f32.mrf.mxu0
        %v2276 = vpop.f32.mrf.mxu0
        %v2277 = vadd.f32 %v2165, %v2276
        %v2278 = vpop.f32.mrf.mxu0
        %2279 = vmatprep.mubr.bf16.mxu0 0
        %2280 = vmatmul.mubr.bf16.gmra.mxu0 %v2116
        %v2281 = vpop.f32.mrf.mxu0
        %v2282 = vadd.f32 %v2165, %v2281
        %v2283 = vpop.f32.mrf.mxu0
        %v2284 = vpop.f32.mrf.mxu0
        %v2285 = vadd.f32 %v2165, %v2284
        %v2286 = vpop.f32.mrf.mxu0
        %2287 = vmatprep.mubr.bf16.mxu0 0
        %2288 = vmatmul.mubr.bf16.gmra.mxu0 %v2117
        %v2289 = vpop.f32.mrf.mxu0
        %v2290 = vadd.f32 %v2165, %v2289
        %v2291 = vpop.f32.mrf.mxu0
        %v2292 = vpop.f32.mrf.mxu0
        %v2293 = vadd.f32 %v2165, %v2292
        %v2294 = vpop.f32.mrf.mxu0
        %2295 = vmatprep.mubr.bf16.mxu0 0
        %2296 = vmatmul.mubr.bf16.gmra.mxu0 %v2118
        %v2297 = vpop.f32.mrf.mxu0
        %v2298 = vadd.f32 %v2165, %v2297
        %v2299 = vpop.f32.mrf.mxu0
        %v2300 = vpop.f32.mrf.mxu0
        %v2301 = vadd.f32 %v2165, %v2300
        %v2302 = vpop.f32.mrf.mxu0
        %2303 = vmatprep.mubr.bf16.mxu0 0
        %2304 = vmatmul.mubr.bf16.gmra.mxu0 %v2119
        %v2305 = vpop.f32.mrf.mxu0
        %v2306 = vadd.f32 %v2165, %v2305
        %v2307 = vpop.f32.mrf.mxu0
        %v2308 = vpop.f32.mrf.mxu0
        %v2309 = vadd.f32 %v2165, %v2308
        %v2310 = vpop.f32.mrf.mxu0
        %2311 = vmatprep.mubr.bf16.mxu0 0
        %2312 = vmatmul.mubr.bf16.gmra.mxu0 %v2120
        %v2313 = vpop.f32.mrf.mxu0
        %v2314 = vadd.f32 %v2165, %v2313
        %v2315 = vpop.f32.mrf.mxu0
        %v2316 = vpop.f32.mrf.mxu0
        %v2317 = vadd.f32 %v2165, %v2316
        %v2318 = vpop.f32.mrf.mxu0
        %2319 = vmatprep.mubr.bf16.mxu0 0
        %2320 = vmatmul.mubr.bf16.gmra.mxu0 %v2121
        %v2321 = vpop.f32.mrf.mxu0
        %v2322 = vadd.f32 %v2165, %v2321
        %v2323 = vpop.f32.mrf.mxu0
        %v2324 = vpop.f32.mrf.mxu0
        %v2325 = vadd.f32 %v2165, %v2324
        %v2326 = vpop.f32.mrf.mxu0
        %2327 = vmatprep.mubr.bf16.mxu0 0
        %2328 = vmatmul.mubr.bf16.gmra.mxu0 %v2122
        %v2329 = vpop.f32.mrf.mxu0
        %v2330 = vadd.f32 %v2165, %v2329
        %v2331 = vpop.f32.mrf.mxu0
        %v2332 = vpop.f32.mrf.mxu0
        %v2333 = vadd.f32 %v2165, %v2332
        %v2334 = vpop.f32.mrf.mxu0
        %2335 = vmatprep.mubr.bf16.mxu0 0
        %2336 = vmatmul.mubr.bf16.gmra.mxu0 %v2123
        %v2337 = vpop.f32.mrf.mxu0
        %v2338 = vadd.f32 %v2165, %v2337
        %v2339 = vpop.f32.mrf.mxu0
        %v2340 = vpop.f32.mrf.mxu0
        %v2341 = vadd.f32 %v2165, %v2340
        %v2342 = vpop.f32.mrf.mxu0
        %2343 = vmatprep.mubr.bf16.mxu0 0
        %2344 = vmatmul.mubr.bf16.gmra.mxu0 %v2124
        %v2345 = vpop.f32.mrf.mxu0
        %v2346 = vadd.f32 %v2165, %v2345
        %v2347 = vpop.f32.mrf.mxu0
        %v2348 = vpop.f32.mrf.mxu0
        %v2349 = vadd.f32 %v2165, %v2348
        %v2350 = vpop.f32.mrf.mxu0
        %2351 = vmatprep.mubr.bf16.mxu0 0
        %2352 = vmatmul.mubr.bf16.gmra.mxu0 %v2125
        %v2353 = vpop.f32.mrf.mxu0
        %v2354 = vadd.f32 %v2165, %v2353
        %v2355 = vpop.f32.mrf.mxu0
        %v2356 = vpop.f32.mrf.mxu0
        %v2357 = vadd.f32 %v2165, %v2356
        %v2358 = vpop.f32.mrf.mxu0
        %2359 = vmatprep.mubr.bf16.mxu0 0
        %2360 = vmatmul.mubr.bf16.gmra.mxu0 %v2126
        %v2361 = vpop.f32.mrf.mxu0
        %v2362 = vadd.f32 %v2165, %v2361
        %v2363 = vpop.f32.mrf.mxu0
        %v2364 = vpop.f32.mrf.mxu0
        %v2365 = vadd.f32 %v2165, %v2364
        %v2366 = vpop.f32.mrf.mxu0
        %2367 = vmatprep.mubr.bf16.mxu0 0
        %2368 = vmatmul.mubr.bf16.gmra.mxu0 %v2127
        %v2369 = vpop.f32.mrf.mxu0
        %v2370 = vadd.f32 %v2165, %v2369
        %v2371 = vpop.f32.mrf.mxu0
        %v2372 = vpop.f32.mrf.mxu0
        %v2373 = vadd.f32 %v2165, %v2372
        %v2374 = vpop.f32.mrf.mxu0
        %2375 = vmatprep.mubr.bf16.mxu0 0
        %2376 = vmatmul.mubr.bf16.gmra.mxu0 %v2128
        %v2377 = vpop.f32.mrf.mxu0
        %v2378 = vadd.f32 %v2165, %v2377
        %v2379 = vpop.f32.mrf.mxu0
        %v2380 = vpop.f32.mrf.mxu0
        %v2381 = vadd.f32 %v2165, %v2380
        %v2382 = vpop.f32.mrf.mxu0
        %2383 = vmatprep.mubr.bf16.mxu0 0
        %2384 = vmatmul.mubr.bf16.gmra.mxu0 %v2129
        %v2385 = vpop.f32.mrf.mxu0
        %v2386 = vadd.f32 %v2165, %v2385
        %v2387 = vpop.f32.mrf.mxu0
        %v2388 = vpop.f32.mrf.mxu0
        %v2389 = vadd.f32 %v2165, %v2388
        %v2390 = vpop.f32.mrf.mxu0
        %2391 = vmatprep.mubr.bf16.mxu0 0
        %2392 = vmatmul.mubr.bf16.gmra.mxu0 %v2130
        %v2393 = vpop.f32.mrf.mxu0
        %v2394 = vadd.f32 %v2165, %v2393
        %v2395 = vpop.f32.mrf.mxu0
        %v2396 = vpop.f32.mrf.mxu0
        %v2397 = vadd.f32 %v2165, %v2396
        %v2398 = vpop.f32.mrf.mxu0
        %2399 = vmatprep.mubr.bf16.mxu0 0
        %2400 = vmatmul.mubr.bf16.gmra.mxu0 %v2131
        %v2401 = vpop.f32.mrf.mxu0
        %v2402 = vadd.f32 %v2165, %v2401
        %v2403 = vpop.f32.mrf.mxu0
        %v2404 = vpop.f32.mrf.mxu0
        %v2405 = vadd.f32 %v2165, %v2404
        %v2406 = vpop.f32.mrf.mxu0
        %2407 = vmatprep.mubr.bf16.mxu0 0
        %2408 = vmatmul.mubr.bf16.gmra.mxu0 %v2132
        %v2409 = vpop.f32.mrf.mxu0
        %v2410 = vadd.f32 %v2165, %v2409
        %v2411 = vpop.f32.mrf.mxu0
        %v2412 = vpop.f32.mrf.mxu0
        %v2413 = vadd.f32 %v2165, %v2412
        %v2414 = vpop.f32.mrf.mxu0
        %2415 = vmatprep.mubr.bf16.mxu0 0
        %2416 = vmatmul.mubr.bf16.gmra.mxu0 %v2133
        %v2417 = vpop.f32.mrf.mxu0
        %v2418 = vadd.f32 %v2165, %v2417
        %v2419 = vpop.f32.mrf.mxu0
        %v2420 = vpop.f32.mrf.mxu0
        %v2421 = vadd.f32 %v2165, %v2420
        %v2422 = vpop.f32.mrf.mxu0
        %2423 = vmatprep.mubr.bf16.mxu0 0
        %2424 = vmatmul.mubr.bf16.gmra.mxu0 %v2134
        %v2425 = vpop.f32.mrf.mxu0
        %v2426 = vadd.f32 %v2165, %v2425
        %v2427 = vpop.f32.mrf.mxu0
        %v2428 = vpop.f32.mrf.mxu0
        %v2429 = vadd.f32 %v2165, %v2428
        %v2430 = vpop.f32.mrf.mxu0
        %2431 = vmatprep.mubr.bf16.mxu0 0
        %2432 = vmatmul.mubr.bf16.gmra.mxu0 %v2135
        %v2433 = vpop.f32.mrf.mxu0
        %v2434 = vadd.f32 %v2165, %v2433
        %v2435 = vpop.f32.mrf.mxu0
        %v2436 = vpop.f32.mrf.mxu0
        %v2437 = vadd.f32 %v2165, %v2436
        %v2438 = vpop.f32.mrf.mxu0
        %2439 = vmatprep.mubr.bf16.mxu0 0
        %2440 = vmatmul.mubr.bf16.gmra.mxu0 %v2136
        %v2441 = vpop.f32.mrf.mxu0
        %v2442 = vadd.f32 %v2165, %v2441
        %v2443 = vpop.f32.mrf.mxu0
        %v2444 = vpop.f32.mrf.mxu0
        %v2445 = vadd.f32 %v2165, %v2444
        %v2446 = vpop.f32.mrf.mxu0
        %2447 = vmatprep.mubr.bf16.mxu0 0
        %2448 = vmatmul.mubr.bf16.gmra.mxu0 %v2137
        %v2449 = vpop.f32.mrf.mxu0
        %v2450 = vadd.f32 %v2165, %v2449
        %v2451 = vpop.f32.mrf.mxu0
        %v2452 = vpop.f32.mrf.mxu0
        %v2453 = vadd.f32 %v2165, %v2452
        %v2454 = vpop.f32.mrf.mxu0
        %2455 = vmatprep.mubr.bf16.mxu0 0
        %2456 = vmatmul.mubr.bf16.gmra.mxu0 %v2138
        %v2457 = vpop.f32.mrf.mxu0
        %v2458 = vadd.f32 %v2165, %v2457
        %v2459 = vpop.f32.mrf.mxu0
        %v2460 = vpop.f32.mrf.mxu0
        %v2461 = vadd.f32 %v2165, %v2460
        %v2462 = vpop.f32.mrf.mxu0
        %2463 = vmatprep.mubr.bf16.mxu0 0
        %2464 = vmatmul.mubr.bf16.gmra.mxu0 %v2139
        %v2465 = vpop.f32.mrf.mxu0
        %v2466 = vadd.f32 %v2165, %v2465
        %v2467 = vpop.f32.mrf.mxu0
        %v2468 = vpop.f32.mrf.mxu0
        %v2469 = vadd.f32 %v2165, %v2468
        %v2470 = vpop.f32.mrf.mxu0
        %2471 = vmatprep.mubr.bf16.mxu0 0
        %2472 = vmatmul.mubr.bf16.gmra.mxu0 %v2140
        %v2473 = vpop.f32.mrf.mxu0
        %v2474 = vadd.f32 %v2165, %v2473
        %v2475 = vpop.f32.mrf.mxu0
        %v2476 = vpop.f32.mrf.mxu0
        %v2477 = vadd.f32 %v2165, %v2476
        %v2478 = vpop.f32.mrf.mxu0
        %2479 = vmatprep.mubr.bf16.mxu0 0
        %2480 = vmatmul.mubr.bf16.gmra.mxu0 %v2141
        %v2481 = vpop.f32.mrf.mxu0
        %v2482 = vadd.f32 %v2165, %v2481
        %v2483 = vpop.f32.mrf.mxu0
        %v2484 = vpop.f32.mrf.mxu0
        %v2485 = vadd.f32 %v2165, %v2484
        %v2486 = vpop.f32.mrf.mxu0
        %2487 = vmatprep.mubr.bf16.mxu0 0
        %2488 = vmatmul.mubr.bf16.gmra.mxu0 %v2142
        %v2489 = vpop.f32.mrf.mxu0
        %v2490 = vadd.f32 %v2165, %v2489
        %v2491 = vpop.f32.mrf.mxu0
        %v2492 = vpop.f32.mrf.mxu0
        %v2493 = vadd.f32 %v2165, %v2492
        %v2494 = vpop.f32.mrf.mxu0
        %2495 = vmatprep.mubr.bf16.mxu0 0
        %2496 = vmatmul.mubr.bf16.gmra.mxu0 %v2143
        %v2497 = vpop.f32.mrf.mxu0
        %v2498 = vadd.f32 %v2165, %v2497
        %v2499 = vpop.f32.mrf.mxu0
        %v2500 = vpop.f32.mrf.mxu0
        %v2501 = vadd.f32 %v2165, %v2500
        %v2502 = vpop.f32.mrf.mxu0
        %2503 = vdwg.mxu0
        %v2504 = vpack.c.bf16 %v2253, %v2250
        %v2505 = vpack.c.bf16 %v2261, %v2258
        %v2506 = vpack.c.bf16 %v2269, %v2266
        %v2507 = vpack.c.bf16 %v2277, %v2274
        %v2508 = vpack.c.bf16 %v2285, %v2282
        %v2509 = vpack.c.bf16 %v2293, %v2290
        %v2510 = vpack.c.bf16 %v2301, %v2298
        %v2511 = vpack.c.bf16 %v2309, %v2306
        %v2512 = vpack.c.bf16 %v2317, %v2314
        %v2513 = vpack.c.bf16 %v2325, %v2322
        %v2514 = vpack.c.bf16 %v2333, %v2330
        %v2515 = vpack.c.bf16 %v2341, %v2338
        %v2516 = vpack.c.bf16 %v2349, %v2346
        %v2517 = vpack.c.bf16 %v2357, %v2354
        %v2518 = vpack.c.bf16 %v2365, %v2362
        %v2519 = vpack.c.bf16 %v2373, %v2370
        %v2520 = vpack.c.bf16 %v2381, %v2378
        %v2521 = vpack.c.bf16 %v2389, %v2386
        %v2522 = vpack.c.bf16 %v2397, %v2394
        %v2523 = vpack.c.bf16 %v2405, %v2402
        %v2524 = vpack.c.bf16 %v2413, %v2410
        %v2525 = vpack.c.bf16 %v2421, %v2418
        %v2526 = vpack.c.bf16 %v2429, %v2426
        %v2527 = vpack.c.bf16 %v2437, %v2434
        %v2528 = vpack.c.bf16 %v2445, %v2442
        %v2529 = vpack.c.bf16 %v2453, %v2450
        %v2530 = vpack.c.bf16 %v2461, %v2458
        %v2531 = vpack.c.bf16 %v2469, %v2466
        %v2532 = vpack.c.bf16 %v2477, %v2474
        %v2533 = vpack.c.bf16 %v2485, %v2482
        %v2534 = vpack.c.bf16 %v2493, %v2490
        %v2535 = vpack.c.bf16 %v2501, %v2498
        %v2568 = vunpack.c.l.b16 %v2504
        %v2569 = vunpack.c.h.b16 %v2504
        %v2570 = vunpack.c.l.b16 %v2505
        %v2571 = vunpack.c.h.b16 %v2505
        %v2572 = vunpack.c.l.b16 %v2506
        %v2573 = vunpack.c.h.b16 %v2506
        %v2574 = vunpack.c.l.b16 %v2507
        %v2575 = vunpack.c.h.b16 %v2507
        %v2576 = vunpack.c.l.b16 %v2508
        %v2577 = vunpack.c.h.b16 %v2508
        %v2578 = vunpack.c.l.b16 %v2509
        %v2579 = vunpack.c.h.b16 %v2509
        %v2580 = vunpack.c.l.b16 %v2510
        %v2581 = vunpack.c.h.b16 %v2510
        %v2582 = vunpack.c.l.b16 %v2511
        %v2583 = vunpack.c.h.b16 %v2511
        %v2584 = vunpack.c.l.b16 %v2512
        %v2585 = vunpack.c.h.b16 %v2512
        %v2586 = vunpack.c.l.b16 %v2513
        %v2587 = vunpack.c.h.b16 %v2513
        %v2588 = vunpack.c.l.b16 %v2514
        %v2589 = vunpack.c.h.b16 %v2514
        %v2590 = vunpack.c.l.b16 %v2515
        %v2591 = vunpack.c.h.b16 %v2515
        %v2592 = vunpack.c.l.b16 %v2516
        %v2593 = vunpack.c.h.b16 %v2516
        %v2594 = vunpack.c.l.b16 %v2517
        %v2595 = vunpack.c.h.b16 %v2517
        %v2596 = vunpack.c.l.b16 %v2518
        %v2597 = vunpack.c.h.b16 %v2518
        %v2598 = vunpack.c.l.b16 %v2519
        %v2599 = vunpack.c.h.b16 %v2519
        %v2600 = vunpack.c.l.b16 %v2520
        %v2601 = vunpack.c.h.b16 %v2520
        %v2602 = vunpack.c.l.b16 %v2521
        %v2603 = vunpack.c.h.b16 %v2521
        %v2604 = vunpack.c.l.b16 %v2522
        %v2605 = vunpack.c.h.b16 %v2522
        %v2606 = vunpack.c.l.b16 %v2523
        %v2607 = vunpack.c.h.b16 %v2523
        %v2608 = vunpack.c.l.b16 %v2524
        %v2609 = vunpack.c.h.b16 %v2524
        %v2610 = vunpack.c.l.b16 %v2525
        %v2611 = vunpack.c.h.b16 %v2525
        %v2612 = vunpack.c.l.b16 %v2526
        %v2613 = vunpack.c.h.b16 %v2526
        %v2614 = vunpack.c.l.b16 %v2527
        %v2615 = vunpack.c.h.b16 %v2527
        %v2616 = vunpack.c.l.b16 %v2528
        %v2617 = vunpack.c.h.b16 %v2528
        %v2618 = vunpack.c.l.b16 %v2529
        %v2619 = vunpack.c.h.b16 %v2529
        %v2620 = vunpack.c.l.b16 %v2530
        %v2621 = vunpack.c.h.b16 %v2530
        %v2622 = vunpack.c.l.b16 %v2531
        %v2623 = vunpack.c.h.b16 %v2531
        %v2624 = vunpack.c.l.b16 %v2532
        %v2625 = vunpack.c.h.b16 %v2532
        %v2626 = vunpack.c.l.b16 %v2533
        %v2627 = vunpack.c.h.b16 %v2533
        %v2628 = vunpack.c.l.b16 %v2534
        %v2629 = vunpack.c.h.b16 %v2534
        %v2630 = vunpack.c.l.b16 %v2535
        %v2631 = vunpack.c.h.b16 %v2535
        %v2632 = vpack.c.b16 %v2568, %v2568
        %v2633 = vpack.c.b16 %v2569, %v2569
        %v2634 = vpack.c.b16 %v2570, %v2570
        %v2635 = vpack.c.b16 %v2571, %v2571
        %v2636 = vpack.c.b16 %v2572, %v2572
        %v2637 = vpack.c.b16 %v2573, %v2573
        %v2638 = vpack.c.b16 %v2574, %v2574
        %v2639 = vpack.c.b16 %v2575, %v2575
        %v2640 = vpack.c.b16 %v2576, %v2576
        %v2641 = vpack.c.b16 %v2577, %v2577
        %v2642 = vpack.c.b16 %v2578, %v2578
        %v2643 = vpack.c.b16 %v2579, %v2579
        %v2644 = vpack.c.b16 %v2580, %v2580
        %v2645 = vpack.c.b16 %v2581, %v2581
        %v2646 = vpack.c.b16 %v2582, %v2582
        %v2647 = vpack.c.b16 %v2583, %v2583
        %v2648 = vpack.c.b16 %v2584, %v2584
        %v2649 = vpack.c.b16 %v2585, %v2585
        %v2650 = vpack.c.b16 %v2586, %v2586
        %v2651 = vpack.c.b16 %v2587, %v2587
        %v2652 = vpack.c.b16 %v2588, %v2588
        %v2653 = vpack.c.b16 %v2589, %v2589
        %v2654 = vpack.c.b16 %v2590, %v2590
        %v2655 = vpack.c.b16 %v2591, %v2591
        %v2656 = vpack.c.b16 %v2592, %v2592
        %v2657 = vpack.c.b16 %v2593, %v2593
        %v2658 = vpack.c.b16 %v2594, %v2594
        %v2659 = vpack.c.b16 %v2595, %v2595
        %v2660 = vpack.c.b16 %v2596, %v2596
        %v2661 = vpack.c.b16 %v2597, %v2597
        %v2662 = vpack.c.b16 %v2598, %v2598
        %v2663 = vpack.c.b16 %v2599, %v2599
        %v2664 = vpack.c.b16 %v2600, %v2600
        %v2665 = vpack.c.b16 %v2601, %v2601
        %v2666 = vpack.c.b16 %v2602, %v2602
        %v2667 = vpack.c.b16 %v2603, %v2603
        %v2668 = vpack.c.b16 %v2604, %v2604
        %v2669 = vpack.c.b16 %v2605, %v2605
        %v2670 = vpack.c.b16 %v2606, %v2606
        %v2671 = vpack.c.b16 %v2607, %v2607
        %v2672 = vpack.c.b16 %v2608, %v2608
        %v2673 = vpack.c.b16 %v2609, %v2609
        %v2674 = vpack.c.b16 %v2610, %v2610
        %v2675 = vpack.c.b16 %v2611, %v2611
        %v2676 = vpack.c.b16 %v2612, %v2612
        %v2677 = vpack.c.b16 %v2613, %v2613
        %v2678 = vpack.c.b16 %v2614, %v2614
        %v2679 = vpack.c.b16 %v2615, %v2615
        %v2680 = vpack.c.b16 %v2616, %v2616
        %v2681 = vpack.c.b16 %v2617, %v2617
        %v2682 = vpack.c.b16 %v2618, %v2618
        %v2683 = vpack.c.b16 %v2619, %v2619
        %v2684 = vpack.c.b16 %v2620, %v2620
        %v2685 = vpack.c.b16 %v2621, %v2621
        %v2686 = vpack.c.b16 %v2622, %v2622
        %v2687 = vpack.c.b16 %v2623, %v2623
        %v2688 = vpack.c.b16 %v2624, %v2624
        %v2689 = vpack.c.b16 %v2625, %v2625
        %v2690 = vpack.c.b16 %v2626, %v2626
        %v2691 = vpack.c.b16 %v2627, %v2627
        %v2692 = vpack.c.b16 %v2628, %v2628
        %v2693 = vpack.c.b16 %v2629, %v2629
        %v2694 = vpack.c.b16 %v2630, %v2630
        %v2695 = vpack.c.b16 %v2631, %v2631
        %2760 = vst [vmem:[%s372] sm:$0xf] %v2632
        %2761 = vst [vmem:[%s372 + $0x4] sm:$0xf] %v2633
        %2762 = vst [vmem:[%s372 + $0x8] sm:$0xf] %v2634
        %2763 = vst [vmem:[%s372 + $0xc] sm:$0xf] %v2635
        %2764 = vst [vmem:[%s372 + $0x10] sm:$0xf] %v2636
        %2765 = vst [vmem:[%s372 + $0x14] sm:$0xf] %v2637
        %2766 = vst [vmem:[%s372 + $0x18] sm:$0xf] %v2638
        %2767 = vst [vmem:[%s372 + $0x1c] sm:$0xf] %v2639
        %2768 = vst [vmem:[%s372 + $0x20] sm:$0xf] %v2640
        %2769 = vst [vmem:[%s372 + $0x24] sm:$0xf] %v2641
        %2770 = vst [vmem:[%s372 + $0x28] sm:$0xf] %v2642
        %2771 = vst [vmem:[%s372 + $0x2c] sm:$0xf] %v2643
        %2772 = vst [vmem:[%s372 + $0x30] sm:$0xf] %v2644
        %2773 = vst [vmem:[%s372 + $0x34] sm:$0xf] %v2645
        %2774 = vst [vmem:[%s372 + $0x38] sm:$0xf] %v2646
        %2775 = vst [vmem:[%s372 + $0x3c] sm:$0xf] %v2647
        %2776 = vst [vmem:[%s372 + $0x40] sm:$0xf] %v2648
        %2777 = vst [vmem:[%s372 + $0x44] sm:$0xf] %v2649
        %2778 = vst [vmem:[%s372 + $0x48] sm:$0xf] %v2650
        %2779 = vst [vmem:[%s372 + $0x4c] sm:$0xf] %v2651
        %2780 = vst [vmem:[%s372 + $0x50] sm:$0xf] %v2652
        %2781 = vst [vmem:[%s372 + $0x54] sm:$0xf] %v2653
        %2782 = vst [vmem:[%s372 + $0x58] sm:$0xf] %v2654
        %2783 = vst [vmem:[%s372 + $0x5c] sm:$0xf] %v2655
        %2784 = vst [vmem:[%s372 + $0x60] sm:$0xf] %v2656
        %2785 = vst [vmem:[%s372 + $0x64] sm:$0xf] %v2657
        %2786 = vst [vmem:[%s372 + $0x68] sm:$0xf] %v2658
        %2787 = vst [vmem:[%s372 + $0x6c] sm:$0xf] %v2659
        %2788 = vst [vmem:[%s372 + $0x70] sm:$0xf] %v2660
        %2789 = vst [vmem:[%s372 + $0x74] sm:$0xf] %v2661
        %2790 = vst [vmem:[%s372 + $0x78] sm:$0xf] %v2662
        %2791 = vst [vmem:[%s372 + $0x7c] sm:$0xf] %v2663
        %2792 = vst [vmem:[%s372 + $0x80] sm:$0xf] %v2664
        %2793 = vst [vmem:[%s372 + $0x84] sm:$0xf] %v2665
        %2794 = vst [vmem:[%s372 + $0x88] sm:$0xf] %v2666
        %2795 = vst [vmem:[%s372 + $0x8c] sm:$0xf] %v2667
        %2796 = vst [vmem:[%s372 + $0x90] sm:$0xf] %v2668
        %2797 = vst [vmem:[%s372 + $0x94] sm:$0xf] %v2669
        %2798 = vst [vmem:[%s372 + $0x98] sm:$0xf] %v2670
        %2799 = vst [vmem:[%s372 + $0x9c] sm:$0xf] %v2671
        %2800 = vst [vmem:[%s372 + $0xa0] sm:$0xf] %v2672
        %2801 = vst [vmem:[%s372 + $0xa4] sm:$0xf] %v2673
        %2802 = vst [vmem:[%s372 + $0xa8] sm:$0xf] %v2674
        %2803 = vst [vmem:[%s372 + $0xac] sm:$0xf] %v2675
        %2804 = vst [vmem:[%s372 + $0xb0] sm:$0xf] %v2676
        %2805 = vst [vmem:[%s372 + $0xb4] sm:$0xf] %v2677
        %2806 = vst [vmem:[%s372 + $0xb8] sm:$0xf] %v2678
        %2807 = vst [vmem:[%s372 + $0xbc] sm:$0xf] %v2679
        %2808 = vst [vmem:[%s372 + $0xc0] sm:$0xf] %v2680
        %2809 = vst [vmem:[%s372 + $0xc4] sm:$0xf] %v2681
        %2810 = vst [vmem:[%s372 + $0xc8] sm:$0xf] %v2682
        %2811 = vst [vmem:[%s372 + $0xcc] sm:$0xf] %v2683
        %2812 = vst [vmem:[%s372 + $0xd0] sm:$0xf] %v2684
        %2813 = vst [vmem:[%s372 + $0xd4] sm:$0xf] %v2685
        %2814 = vst [vmem:[%s372 + $0xd8] sm:$0xf] %v2686
        %2815 = vst [vmem:[%s372 + $0xdc] sm:$0xf] %v2687
        %2816 = vst [vmem:[%s372 + $0xe0] sm:$0xf] %v2688
        %2817 = vst [vmem:[%s372 + $0xe4] sm:$0xf] %v2689
        %2818 = vst [vmem:[%s372 + $0xe8] sm:$0xf] %v2690
        %2819 = vst [vmem:[%s372 + $0xec] sm:$0xf] %v2691
        %2820 = vst [vmem:[%s372 + $0xf0] sm:$0xf] %v2692
        %2821 = vst [vmem:[%s372 + $0xf4] sm:$0xf] %v2693
        %2822 = vst [vmem:[%s372 + $0xf8] sm:$0xf] %v2694
        %2823 = vst [vmem:[%s372 + $0xfc] sm:$0xf] %v2695
        %s2824 = sand.u32 %s231, 1
        %s2825 = scalar_lea.sflag [#allocation4], %s2824
        %s2826 = sand.u32 %s231, 1
        %s2827 = smul.addr %s2826, 256
        %s2828 = scalar_lea.vmem [#allocation3], %s2827
        // Predicated region
        $region57: #{tpu_custom_call.1} parent=55 // pred_check
          %p2829 = pneg %p241
        $region58: #{tpu_custom_call.1} parent=55 // pred_check_branch
          %2831 = sbr.rel (%p2829) target = $region60
        $region59: #{tpu_custom_call.1} parent=55 // pred_region
          %s2832 = smul.u32 64, %s24
          %s2833 = ssub.s32 98, %s2832
          %p2834 = scmp.lt.s32.totalorder %s2833, 64
          %s2835 = scalar_select %p2834, %s2833, 64
          %s2836 = smul.u32 64, %s2835
          %s2838 = ssub.s32 4096, %s2836
          %2839 = vsyncadd %s2825, %s2838
          %p2840 = scmp.ne.s32.totalorder 0, %s2836
          %s2841 = smul.addr %s2832, 64
          %s2842 = scalar_lea.hbm %s9, %s2841
          %s2843 = smul.u32 4, %s2835
          %s2844 = sshll.u32 %s2828, 4
          %s2845 = int_to_ptr.vmem [resolvable:$true] %s2844
          %s2846 = sshll.u32 %s2843, 4
          %2850 = dma.vmem_to_hbm [thread:$0]  (%p2840), %s2845, %s2846, %s2842, %s2825, 64, 64, 4
        $region60: #{tpu_custom_call.1} parent=55 // pred_fallthru
          _
      $region56: #{tpu_custom_call.1} parent=5 // pred_fallthru
        _
      %p2851 = scmp.le.s32.totalorder 2, %s19
      // Predicated region
      $region61: #{tpu_custom_call.1} parent=5 // pred_check
        %p2852 = pneg %p2851
      $region62: #{tpu_custom_call.1} parent=5 // pred_check_branch
        %2854 = sbr.rel (%p2852) target = $region64
      $region63: #{tpu_custom_call.1} parent=5 // pred_region
        %s2855 = ssub.s32 %s19, 2
        // Predicated region
        $region65: #{tpu_custom_call.1} parent=63 // pred_check
          %p2856 = pneg %p247
        $region66: #{tpu_custom_call.1} parent=63 // pred_check_branch
          %2858 = sbr.rel (%p2856) target = $region68
        $region67: #{tpu_custom_call.1} parent=63 // pred_region
          %s2859 = sand.u32 %s232, 1
          %s2860 = scalar_lea.sflag [#allocation4], %s2859
          %s2861 = sand.u32 %s232, 1
          %s2862 = smul.addr %s2861, 256
          %s2863 = scalar_lea.vmem [#allocation3], %s2862
          %2864 = dma.done %s2860, 4096
        $region68: #{tpu_custom_call.1} parent=63 // pred_fallthru
          _
      $region64: #{tpu_custom_call.1} parent=5 // pred_fallthru
        _
    $region6: #{tpu_custom_call.1} parent=1 // loop_footer
      %s23 = sadd.s32 1, %s19
    $region7: #{tpu_custom_call.1} parent=1 // loop_footer_branch
      %18 = sbr.rel target = $region3
    $region8: #{tpu_custom_call.1} parent=1 // loop_exit
      _
    %2865 = vsyncpa [#allocation4], 1
    %s2866 = scalar_lea.sflag [#allocation4], 1
    %2867 = vsyncpa %s2866, 1

</llo_original>
